<compile_context>
chip_gen: v7x
topology: tpu7x:2x2x1
jax: 0.10.0
libtpu: 0.0.40
codegen_flags: <defaults>
</compile_context>

<pallas_src>
import jax
import jax.numpy as jnp
from jax.experimental import pallas as pl
from jax.experimental.pallas import tpu as pltpu


# ---------------------------------------------------------------------------
# Kernel
# ---------------------------------------------------------------------------
def gnn_layer_kernel(adj_ref,     # (T,  Vp)     int8  adjacency row tile (1 = edge u->v)
                     hdst_ref,    # (T,  Fp)     f32   destination-row features
                     srow_ref,    # (1,  Vp)     f32   precomputed h·w_src + b_e
                     hv_ref,      # (Vp, Hp)     bf16  precomputed project_node(h)
                     wi_ref,      # (Hp, 3Fp)    bf16  fused input-gate weights [r|z|n]
                     bi_ref,      # (1,  3Fp)    f32
                     wh_ref,      # (Fp, 3Fp+128) bf16 fused hidden-gate weights + w_dst col
                     bh_ref,      # (1,  3Fp+128) f32
                     out_ref):    # (T,  Fp)     f32
    f32 = jnp.float32
    bf16 = jnp.bfloat16
    Fp = hdst_ref.shape[1]
    G = 3 * Fp                    # gate width; s_dst lives at lane G of the gh matmul

    h_dst = hdst_ref[...]                       # (T, Fp) f32 (needed f32 for GRU blend)
    h_dst_b = h_dst.astype(bf16)

    # ---- hidden-side GRU gates + fused destination edge score (h_dst only) ----
    gh = jnp.dot(h_dst_b, wh_ref[...], preferred_element_type=f32) + bh_ref[...]  # (T, 3Fp+128)
    s_dst = gh[:, G:G + 1]                                                          # (T, 1)

    # ---- edge logits:  logit[v,u] = h[v]·w_dst + h[u]·w_src + b_e, LeakyReLU ----
    logits = s_dst + srow_ref[...]                                                  # (T, Vp)
    logits = jnp.where(logits >= 0.0, logits, 0.01 * logits)

    # ---- masked edge softmax over incoming edges ----
    # Non-edges get exact zeros; zero-in-degree rows (incl. padding rows) give an
    # all-zero attention row, matching DGL's edge_softmax + sum aggregation.
    adjf = adj_ref[...].astype(f32)
    edge = adjf > 0.0
    masked = jnp.where(edge, logits, -1e30)
    m = jnp.max(masked, axis=-1, keepdims=True)          # true row max (stable exp)
    e = jnp.where(edge, jnp.exp(masked - m), 0.0)         # (T, Vp) unnormalized weights
    denom = jnp.sum(e, axis=-1, keepdims=True)            # (T, 1)

    # ---- message passing on unnormalized weights; normalize after the matmul ----
    c = jnp.dot(e.astype(bf16), hv_ref[...], preferred_element_type=f32)            # (T, Hp)
    c = c * pl.reciprocal(jnp.maximum(denom, 1e-20), approx=True)
    context = jnp.where(c > 0.0, c, jnp.exp(jnp.minimum(c, 0.0)) - 1.0)              # ELU

    # ---- GRUCell(input=context, hidden=h_dst), fused gate matmuls, final ReLU ----
    gi = jnp.dot(context.astype(bf16), wi_ref[...], preferred_element_type=f32) + bi_ref[...]
    r = jax.nn.sigmoid(gi[:, 0:Fp] + gh[:, 0:Fp])
    z = jax.nn.sigmoid(gi[:, Fp:2 * Fp] + gh[:, Fp:2 * Fp])
    n = jnp.tanh(gi[:, 2 * Fp:3 * Fp] + r * gh[:, 2 * Fp:3 * Fp])
    h_new = (1.0 - z) * n + z * h_dst
    out_ref[...] = jnp.maximum(h_new, 0.0)


# ---------------------------------------------------------------------------
# Wrapper: padding, hoisted precomputes, weight fusion, grid / BlockSpecs
# ---------------------------------------------------------------------------
def _round_up(x, m):
    return (x + m - 1) // m * m


def _pick_tile(vp, tile_v):
    if tile_v is not None:
        assert vp % tile_v == 0 and (tile_v % 32 == 0 or tile_v == vp)
        return tile_v
    for t in (512, 256, 128):
        if vp % t == 0:
            return t
    return vp


def _vmem_limit_bytes():
    # ~3/4 of physical VMEM (headroom for compiler scratch): ~48 MiB on v7x,
    # ~96 MiB on v5e/v6e.  Falls back to a value safe on every generation.
    try:
        cap = int(pltpu.get_tpu_info().vmem_capacity_bytes)
        return max(32 * 1024 * 1024, (cap // 4) * 3)
    except Exception:
        return 48 * 1024 * 1024


def gnn_layer(node_feats, adj, params, *, tile_v=None):
    """adj[v, u] = 1 iff there is an edge u -> v (row = destination)."""
    f32, bf16 = jnp.float32, jnp.bfloat16
    V, F = node_feats.shape
    H = params["w_node"].shape[1]

    Fp = _round_up(F, 128)
    Hp = _round_up(H, 128)
    Vp = _round_up(V, 128)
    T = _pick_tile(Vp, tile_v)
    G = 3 * Fp

    # --- pad node features; adjacency streamed as int8 (4x less HBM than f32) ---
    h_p = jnp.zeros((Vp, Fp), f32).at[:V, :F].set(node_feats.astype(f32))
    h_b = h_p.astype(bf16)
    adj_i8 = jnp.zeros((Vp, Vp), jnp.int8).at[:V, :V].set((adj > 0).astype(jnp.int8))

    # --- hoisted grid-invariant precomputes (bf16 MXU operands, f32 accumulation) ---
    # source-side edge score row with the edge bias folded in: s_src[u] = h[u]·w_src + b_e
    w_src = jnp.zeros((Fp, 1), f32).at[:F, :].set(params["w_src"]).astype(bf16)
    b_edge = jnp.asarray(params["b_edge"], f32)
    s_row = (jnp.dot(h_b, w_src, preferred_element_type=f32) + b_edge).reshape(1, Vp)

    # project_node: hv = h @ w_node + b_node  (resident bf16 message table)
    w_node = jnp.zeros((Fp, Hp), f32).at[:F, :H].set(params["w_node"]).astype(bf16)
    b_node = jnp.zeros((1, Hp), f32).at[:, :H].set(params["b_node"].reshape(1, H))
    hv = (jnp.dot(h_b, w_node, preferred_element_type=f32) + b_node).astype(bf16)

    # --- GRU gates fused: gate g at lane offset g*Fp; w_dst fused as an extra
    #     128-lane block (column G) of w_h so s_dst drops out of the gh matmul ---
    w_i = jnp.zeros((Hp, G), f32)
    b_i = jnp.zeros((1, G), f32)
    w_h = jnp.zeros((Fp, G + 128), f32)
    b_h = jnp.zeros((1, G + 128), f32)
    for g, name in enumerate(("r", "z", "n")):
        w_i = w_i.at[:H, g * Fp:g * Fp + F].set(params[f"w_i{name}"])
        w_h = w_h.at[:F, g * Fp:g * Fp + F].set(params[f"w_h{name}"])
        b_i = b_i.at[:, g * Fp:g * Fp + F].set(params[f"b_i{name}"].reshape(1, F))
        b_h = b_h.at[:, g * Fp:g * Fp + F].set(params[f"b_h{name}"].reshape(1, F))
    w_h = w_h.at[:F, G:G + 1].set(params["w_dst"])       # fused s_dst column
    w_i = w_i.astype(bf16)
    w_h = w_h.astype(bf16)

    # --- grid + BlockSpecs ---
    def resident(shape):
        return pl.BlockSpec(shape, lambda i, _n=len(shape): (0,) * _n)

    grid = (Vp // T,)
    in_specs = [
        pl.BlockSpec((T, Vp), lambda i: (i, 0)),   # adjacency row tile (int8, streamed)
        pl.BlockSpec((T, Fp), lambda i: (i, 0)),   # h_dst tile (f32, streamed)
        resident((1, Vp)),                         # s_src + b_e (f32)
        resident((Vp, Hp)),                        # hv (bf16)
        resident((Hp, G)),                         # w_i
        resident((1, G)),                          # b_i
        resident((Fp, G + 128)),                   # w_h (+ w_dst column)
        resident((1, G + 128)),                    # b_h
    ]
    out_spec = pl.BlockSpec((T, Fp), lambda i: (i, 0))

    out_p = pl.pallas_call(
        gnn_layer_kernel,
        out_shape=jax.ShapeDtypeStruct((Vp, Fp), f32),
        grid_spec=pltpu.PrefetchScalarGridSpec(
            num_scalar_prefetch=0,
            grid=grid,
            in_specs=in_specs,
            out_specs=out_spec,
        ),
        compiler_params=pltpu.CompilerParams(
            dimension_semantics=("parallel",),       # row tiles shard across TCs (v7x)
            vmem_limit_bytes=_vmem_limit_bytes(),
        ),
    )(adj_i8, h_p, s_row, hv, w_i, b_i, w_h, b_h)

    return out_p[:V, :F]


# ---------------------------------------------------------------------------
# Pure-JAX references (true DGL/PyTorch semantics; optional bf16-operand emulation)
# ---------------------------------------------------------------------------
def gnn_layer_ref(node_feats, adj, p, matmul_dtype=None):
    def dot(a, b):
        if matmul_dtype is not None:
            a, b = a.astype(matmul_dtype), b.astype(matmul_dtype)
        return jnp.dot(a, b, preferred_element_type=jnp.float32)

    h = node_feats
    s_dst = dot(h, p["w_dst"])                 # (V, 1)
    s_src = dot(h, p["w_src"]).T               # (1, V)
    logits = s_dst + s_src + p["b_edge"]
    logits = jnp.where(logits >= 0.0, logits, 0.01 * logits)
    masked = jnp.where(adj > 0.0, logits, -1e30)
    m = jnp.max(masked, axis=-1, keepdims=True)
    e = jnp.where(adj > 0.0, jnp.exp(masked - m), 0.0)
    denom = jnp.sum(e, axis=-1, keepdims=True)
    a = e / jnp.where(denom > 0.0, denom, 1.0)
    hv = dot(h, p["w_node"]) + p["b_node"]
    c = dot(a, hv)
    context = jnp.where(c > 0.0, c, jnp.exp(jnp.minimum(c, 0.0)) - 1.0)
    r = jax.nn.sigmoid(dot(context, p["w_ir"]) + p["b_ir"] + dot(h, p["w_hr"]) + p["b_hr"])
    z = jax.nn.sigmoid(dot(context, p["w_iz"]) + p["b_iz"] + dot(h, p["w_hz"]) + p["b_hz"])
    n = jnp.tanh(dot(context, p["w_in"]) + p["b_in"] + r * (dot(h, p["w_hn"]) + p["b_hn"]))
    return jnp.maximum((1.0 - z) * n + z * h, 0.0)


def make_params(key, node_feat_size, graph_feat_size):
    """Synthetic parameters mirroring the PyTorch module's shapes (distinct keys)."""
    F, H = node_feat_size, graph_feat_size
    ks = jax.random.split(key, 17)

    def u(k, shape, fan_in):
        b = 1.0 / float(fan_in) ** 0.5
        return jax.random.uniform(k, shape, jnp.float32, -b, b)

    return {
        # project_edge: Linear(2F -> 1), split into dst/src halves
        "w_dst": u(ks[0], (F, 1), 2 * F),
        "w_src": u(ks[1], (F, 1), 2 * F),
        "b_edge": u(ks[2], (), 2 * F),
        # project_node: Linear(F -> H), pre-transposed to (F, H)
        "w_node": u(ks[3], (F, H), F),
        "b_node": u(ks[4], (H,), F),
        # GRUCell(input=H, hidden=F), per-gate weights pre-transposed
        "w_ir": u(ks[5], (H, F), F), "w_iz": u(ks[6], (H, F), F), "w_in": u(ks[7], (H, F), F),
        "w_hr": u(ks[8], (F, F), F), "w_hz": u(ks[9], (F, F), F), "w_hn": u(ks[10], (F, F), F),
        "b_ir": u(ks[11], (F,), F), "b_iz": u(ks[12], (F,), F), "b_in": u(ks[13], (F,), F),
        "b_hr": u(ks[14], (F,), F), "b_hz": u(ks[15], (F,), F), "b_hn": u(ks[16], (F,), F),
    }


if __name__ == "__main__":
    V = 80                 # number of nodes (padded to 128 internally)
    node_feat_size = 32    # F
    graph_feat_size = 48   # H

    key = jax.random.PRNGKey(0)
    k_feat, k_adj, k_param = jax.random.split(key, 3)

    node_feats = jax.random.normal(k_feat, (V, node_feat_size), jnp.float32)
    # random directed graph; adj[v, u] = 1 iff edge u -> v
    adj = jax.random.bernoulli(k_adj, 0.3, (V, V)).astype(jnp.float32)
    adj = adj.at[3, :].set(0.0)   # one zero-in-degree node to exercise that path

    params = make_params(k_param, node_feat_size, graph_feat_size)

    # tile_v=64 -> grid of 2 row tiles at this small size (exercises the pipeline).
    out = gnn_layer(node_feats, adj, params, tile_v=64)
    out = jax.block_until_ready(out)

    ref_bf16 = gnn_layer_ref(node_feats, adj, params, matmul_dtype=jnp.bfloat16)
    ref_f32 = gnn_layer_ref(node_feats, adj, params)

    assert out.shape == (V, node_feat_size)
    assert bool(jnp.all(jnp.isfinite(out)))
    # bf16-operand emulation check (kernel uses post-matmul normalization +
    # approximate reciprocal, so tolerances are moderate rather than tight).
    assert jnp.allclose(out, ref_bf16, atol=3e-2, rtol=3e-2)
    # Full-f32 semantic sanity check.
    assert jnp.allclose(out, ref_f32, atol=6e-2, rtol=6e-2)
    print("KERNEL_OK")
</pallas_src>

<mosaic_0001>
module attributes {stable_mosaic.version = 11 : i64} {
  func.func @gnn_layer_kernel(%arg0: i32, %arg1: memref<64x128xi8, #tpu.memory_space<vmem>>, %arg2: memref<64x128xf32, #tpu.memory_space<vmem>>, %arg3: memref<1x128xf32, #tpu.memory_space<vmem>>, %arg4: memref<128x128xbf16, #tpu.memory_space<vmem>>, %arg5: memref<128x384xbf16, #tpu.memory_space<vmem>>, %arg6: memref<1x384xf32, #tpu.memory_space<vmem>>, %arg7: memref<128x512xbf16, #tpu.memory_space<vmem>>, %arg8: memref<1x512xf32, #tpu.memory_space<vmem>>, %arg9: memref<64x128xf32, #tpu.memory_space<vmem>>) attributes {dimension_semantics = [#tpu.dimension_semantics<parallel>], iteration_bounds = array<i64: 2>, scalar_prefetch = 0 : i64, scratch_operands = 0 : i64, tpu.core_type = #tpu.core_type<tc>, window_params = [{transform_indices = @transform_0, window_bounds = array<i64: 64, 128>}, {transform_indices = @transform_1, window_bounds = array<i64: 64, 128>}, {pipeline_mode = #tpu.pipeline_mode<synchronous>, transform_indices = @transform_2, window_bounds = array<i64: 1, 128>}, {pipeline_mode = #tpu.pipeline_mode<synchronous>, transform_indices = @transform_3, window_bounds = array<i64: 128, 128>}, {pipeline_mode = #tpu.pipeline_mode<synchronous>, transform_indices = @transform_4, window_bounds = array<i64: 128, 384>}, {pipeline_mode = #tpu.pipeline_mode<synchronous>, transform_indices = @transform_5, window_bounds = array<i64: 1, 384>}, {pipeline_mode = #tpu.pipeline_mode<synchronous>, transform_indices = @transform_6, window_bounds = array<i64: 128, 512>}, {pipeline_mode = #tpu.pipeline_mode<synchronous>, transform_indices = @transform_7, window_bounds = array<i64: 1, 512>}, {transform_indices = @transform_8, window_bounds = array<i64: 64, 128>}]} {
    %c0 = arith.constant 0 : index
    %c0_0 = arith.constant 0 : index
    %0 = vector.load %arg2[%c0, %c0_0] : memref<64x128xf32, #tpu.memory_space<vmem>>, vector<64x128xf32>
    %1 = arith.truncf %0 : vector<64x128xf32> to vector<64x128xbf16>
    %c0_1 = arith.constant 0 : index
    %c0_2 = arith.constant 0 : index
    %2 = vector.load %arg7[%c0_1, %c0_2] : memref<128x512xbf16, #tpu.memory_space<vmem>>, vector<128x512xbf16>
    %cst = arith.constant dense<0.000000e+00> : vector<64x512xf32>
    %3 = tpu.matmul %1, %2, %cst {dimension_numbers = #tpu.dot_dimension_numbers<[1], [0], [0], [1], [0, 0, 1, 1], [], []>} : vector<64x128xbf16>, vector<128x512xbf16>, vector<64x512xf32> -> vector<64x512xf32>
    %c0_3 = arith.constant 0 : index
    %c0_4 = arith.constant 0 : index
    %4 = vector.load %arg8[%c0_3, %c0_4] : memref<1x512xf32, #tpu.memory_space<vmem>>, vector<1x512xf32>
    %5 = vector.broadcast %4 : vector<1x512xf32> to vector<64x512xf32>
    %6 = arith.addf %3, %5 : vector<64x512xf32>
    %7 = vector.extract_strided_slice %6 {offsets = [0, 384], sizes = [64, 1], strides = [1, 1]} : vector<64x512xf32> to vector<64x1xf32>
    %c0_5 = arith.constant 0 : index
    %c0_6 = arith.constant 0 : index
    %8 = vector.load %arg3[%c0_5, %c0_6] : memref<1x128xf32, #tpu.memory_space<vmem>>, vector<1x128xf32>
    %9 = vector.broadcast %7 : vector<64x1xf32> to vector<64x128xf32>
    %10 = vector.broadcast %8 : vector<1x128xf32> to vector<64x128xf32>
    %11 = arith.addf %9, %10 : vector<64x128xf32>
    %cst_7 = arith.constant 0.000000e+00 : f32
    %12 = vector.broadcast %cst_7 : f32 to vector<64x128xf32>
    %13 = arith.cmpf oge, %11, %12 : vector<64x128xf32>
    %cst_8 = arith.constant 0.00999999977 : f32
    %14 = vector.broadcast %cst_8 : f32 to vector<64x128xf32>
    %15 = arith.mulf %14, %11 : vector<64x128xf32>
    %16 = arith.select %13, %11, %15 : vector<64x128xi1>, vector<64x128xf32>
    %c0_9 = arith.constant 0 : index
    %c0_10 = arith.constant 0 : index
    %17 = vector.load %arg1[%c0_9, %c0_10] : memref<64x128xi8, #tpu.memory_space<vmem>>, vector<64x128xi8>
    %18 = arith.sitofp %17 : vector<64x128xi8> to vector<64x128xf32>
    %cst_11 = arith.constant 0.000000e+00 : f32
    %19 = vector.broadcast %cst_11 : f32 to vector<64x128xf32>
    %20 = arith.cmpf ogt, %18, %19 : vector<64x128xf32>
    %cst_12 = arith.constant -1.000000e+30 : f32
    %21 = vector.broadcast %cst_12 : f32 to vector<64x128xf32>
    %22 = arith.select %20, %16, %21 : vector<64x128xi1>, vector<64x128xf32>
    %cst_13 = arith.constant dense<0xFF800000> : vector<64xf32>
    %23 = vector.multi_reduction <maximumf>, %22, %cst_13 [1] : vector<64x128xf32> to vector<64xf32>
    %24 = vector.shape_cast %23 : vector<64xf32> to vector<64x1xf32>
    %25 = vector.broadcast %24 : vector<64x1xf32> to vector<64x128xf32>
    %26 = arith.subf %22, %25 : vector<64x128xf32>
    %27 = math.exp %26 : vector<64x128xf32>
    %cst_14 = arith.constant 0.000000e+00 : f32
    %28 = vector.broadcast %cst_14 : f32 to vector<64x128xf32>
    %29 = arith.select %20, %27, %28 : vector<64x128xi1>, vector<64x128xf32>
    %cst_15 = arith.constant dense<0.000000e+00> : vector<64xf32>
    %30 = vector.multi_reduction <add>, %29, %cst_15 [1] : vector<64x128xf32> to vector<64xf32>
    %31 = vector.shape_cast %30 : vector<64xf32> to vector<64x1xf32>
    %32 = arith.truncf %29 : vector<64x128xf32> to vector<64x128xbf16>
    %c0_16 = arith.constant 0 : index
    %c0_17 = arith.constant 0 : index
    %33 = vector.load %arg4[%c0_16, %c0_17] : memref<128x128xbf16, #tpu.memory_space<vmem>>, vector<128x128xbf16>
    %cst_18 = arith.constant dense<0.000000e+00> : vector<64x128xf32>
    %34 = tpu.matmul %32, %33, %cst_18 {dimension_numbers = #tpu.dot_dimension_numbers<[1], [0], [0], [1], [0, 0, 1, 1], [], []>} : vector<64x128xbf16>, vector<128x128xbf16>, vector<64x128xf32> -> vector<64x128xf32>
    %cst_19 = arith.constant 9.99999968E-21 : f32
    %35 = vector.broadcast %cst_19 : f32 to vector<64x1xf32>
    %36 = arith.maximumf %31, %35 : vector<64x1xf32>
    %37 = tpu.reciprocal %36 {approx = true} : vector<64x1xf32> -> vector<64x1xf32>
    %38 = vector.broadcast %37 : vector<64x1xf32> to vector<64x128xf32>
    %39 = arith.mulf %34, %38 : vector<64x128xf32>
    %cst_20 = arith.constant 0.000000e+00 : f32
    %40 = vector.broadcast %cst_20 : f32 to vector<64x128xf32>
    %41 = arith.cmpf ogt, %39, %40 : vector<64x128xf32>
    %cst_21 = arith.constant 0.000000e+00 : f32
    %42 = vector.broadcast %cst_21 : f32 to vector<64x128xf32>
    %43 = arith.minimumf %39, %42 : vector<64x128xf32>
    %44 = math.exp %43 : vector<64x128xf32>
    %cst_22 = arith.constant 1.000000e+00 : f32
    %45 = vector.broadcast %cst_22 : f32 to vector<64x128xf32>
    %46 = arith.subf %44, %45 : vector<64x128xf32>
    %47 = arith.select %41, %39, %46 : vector<64x128xi1>, vector<64x128xf32>
    %48 = arith.truncf %47 : vector<64x128xf32> to vector<64x128xbf16>
    %c0_23 = arith.constant 0 : index
    %c0_24 = arith.constant 0 : index
    %49 = vector.load %arg5[%c0_23, %c0_24] : memref<128x384xbf16, #tpu.memory_space<vmem>>, vector<128x384xbf16>
    %cst_25 = arith.constant dense<0.000000e+00> : vector<64x384xf32>
    %50 = tpu.matmul %48, %49, %cst_25 {dimension_numbers = #tpu.dot_dimension_numbers<[1], [0], [0], [1], [0, 0, 1, 1], [], []>} : vector<64x128xbf16>, vector<128x384xbf16>, vector<64x384xf32> -> vector<64x384xf32>
    %c0_26 = arith.constant 0 : index
    %c0_27 = arith.constant 0 : index
    %51 = vector.load %arg6[%c0_26, %c0_27] : memref<1x384xf32, #tpu.memory_space<vmem>>, vector<1x384xf32>
    %52 = vector.broadcast %51 : vector<1x384xf32> to vector<64x384xf32>
    %53 = arith.addf %50, %52 : vector<64x384xf32>
    %54 = vector.extract_strided_slice %53 {offsets = [0, 0], sizes = [64, 128], strides = [1, 1]} : vector<64x384xf32> to vector<64x128xf32>
    %55 = vector.extract_strided_slice %6 {offsets = [0, 0], sizes = [64, 128], strides = [1, 1]} : vector<64x512xf32> to vector<64x128xf32>
    %56 = arith.addf %54, %55 : vector<64x128xf32>
    %57 = arith.negf %56 : vector<64x128xf32>
    %58 = math.exp %57 : vector<64x128xf32>
    %cst_28 = arith.constant 1.000000e+00 : f32
    %59 = vector.broadcast %cst_28 : f32 to vector<64x128xf32>
    %60 = arith.addf %59, %58 : vector<64x128xf32>
    %61 = arith.divf %59, %60 : vector<64x128xf32>
    %62 = vector.extract_strided_slice %53 {offsets = [0, 128], sizes = [64, 128], strides = [1, 1]} : vector<64x384xf32> to vector<64x128xf32>
    %63 = vector.extract_strided_slice %6 {offsets = [0, 128], sizes = [64, 128], strides = [1, 1]} : vector<64x512xf32> to vector<64x128xf32>
    %64 = arith.addf %62, %63 : vector<64x128xf32>
    %65 = arith.negf %64 : vector<64x128xf32>
    %66 = math.exp %65 : vector<64x128xf32>
    %cst_29 = arith.constant 1.000000e+00 : f32
    %67 = vector.broadcast %cst_29 : f32 to vector<64x128xf32>
    %68 = arith.addf %67, %66 : vector<64x128xf32>
    %69 = arith.divf %67, %68 : vector<64x128xf32>
    %70 = vector.extract_strided_slice %53 {offsets = [0, 256], sizes = [64, 128], strides = [1, 1]} : vector<64x384xf32> to vector<64x128xf32>
    %71 = vector.extract_strided_slice %6 {offsets = [0, 256], sizes = [64, 128], strides = [1, 1]} : vector<64x512xf32> to vector<64x128xf32>
    %72 = arith.mulf %61, %71 : vector<64x128xf32>
    %73 = arith.addf %70, %72 : vector<64x128xf32>
    %74 = math.tanh %73 : vector<64x128xf32>
    %cst_30 = arith.constant 1.000000e+00 : f32
    %75 = vector.broadcast %cst_30 : f32 to vector<64x128xf32>
    %76 = arith.subf %75, %69 : vector<64x128xf32>
    %77 = arith.mulf %76, %74 : vector<64x128xf32>
    %78 = arith.mulf %69, %0 : vector<64x128xf32>
    %79 = arith.addf %77, %78 : vector<64x128xf32>
    %cst_31 = arith.constant 0.000000e+00 : f32
    %80 = vector.broadcast %cst_31 : f32 to vector<64x128xf32>
    %81 = arith.maximumf %79, %80 : vector<64x128xf32>
    %c0_32 = arith.constant 0 : index
    %c0_33 = arith.constant 0 : index
    %82 = vector.load %arg9[%c0_32, %c0_33] : memref<64x128xf32, #tpu.memory_space<vmem>>, vector<64x128xf32>
    tpu.vector_store %arg9[%c0_32, %c0_33], %81 {strides = array<i32>} : memref<64x128xf32, #tpu.memory_space<vmem>>, vector<64x128xf32>,
    return
  }
  func.func @transform_0(%arg0: i32) -> (i32, i32) {
    %c0_i32 = arith.constant 0 : i32
    %c0_i32_0 = arith.constant 0 : i32
    return %arg0, %c0_i32 : i32, i32
  }
  func.func @transform_1(%arg0: i32) -> (i32, i32) {
    %c0_i32 = arith.constant 0 : i32
    %c0_i32_0 = arith.constant 0 : i32
    return %arg0, %c0_i32 : i32, i32
  }
  func.func @transform_2(%arg0: i32) -> (i32, i32) {
    %c0_i32 = arith.constant 0 : i32
    %c0_i32_0 = arith.constant 0 : i32
    %c0_i32_1 = arith.constant 0 : i32
    return %c0_i32, %c0_i32_0 : i32, i32
  }
  func.func @transform_3(%arg0: i32) -> (i32, i32) {
    %c0_i32 = arith.constant 0 : i32
    %c0_i32_0 = arith.constant 0 : i32
    %c0_i32_1 = arith.constant 0 : i32
    return %c0_i32, %c0_i32_0 : i32, i32
  }
  func.func @transform_4(%arg0: i32) -> (i32, i32) {
    %c0_i32 = arith.constant 0 : i32
    %c0_i32_0 = arith.constant 0 : i32
    %c0_i32_1 = arith.constant 0 : i32
    return %c0_i32, %c0_i32_0 : i32, i32
  }
  func.func @transform_5(%arg0: i32) -> (i32, i32) {
    %c0_i32 = arith.constant 0 : i32
    %c0_i32_0 = arith.constant 0 : i32
    %c0_i32_1 = arith.constant 0 : i32
    return %c0_i32, %c0_i32_0 : i32, i32
  }
  func.func @transform_6(%arg0: i32) -> (i32, i32) {
    %c0_i32 = arith.constant 0 : i32
    %c0_i32_0 = arith.constant 0 : i32
    %c0_i32_1 = arith.constant 0 : i32
    return %c0_i32, %c0_i32_0 : i32, i32
  }
  func.func @transform_7(%arg0: i32) -> (i32, i32) {
    %c0_i32 = arith.constant 0 : i32
    %c0_i32_0 = arith.constant 0 : i32
    %c0_i32_1 = arith.constant 0 : i32
    return %c0_i32, %c0_i32_0 : i32, i32
  }
  func.func @transform_8(%arg0: i32) -> (i32, i32) {
    %c0_i32 = arith.constant 0 : i32
    %c0_i32_0 = arith.constant 0 : i32
    return %arg0, %c0_i32 : i32, i32
  }
}

</mosaic_0001>

<llo_original>
// kernel: tpu_custom_call.1
$region0: #{tpu_custom_call.1}
  #allocation0 [shape = 'u32[]', space=smem, size = 0x4, offset = 0x4, fixed_abs, tag = 'smem constant byte address 0x4 - core index']
  #allocation1 [shape = 'u32[144,128]{1,0:T(1,128)}', space=vmem, size = 0x12000, scoped, tag = 'internal scratch']
  %s0 = inlined_call_operand.hbm [shape: s8[128,128], index: 0, kind: input, shape index: {}]
  %s1 = inlined_call_operand.hbm [shape: f32[128,128], index: 1, kind: input, shape index: {}]
  %s2 = inlined_call_operand.hbm [shape: f32[1,128], index: 2, kind: input, shape index: {}]
  %s3 = inlined_call_operand.hbm [shape: bf16[128,128], index: 3, kind: input, shape index: {}]
  %s4 = inlined_call_operand.hbm [shape: bf16[128,384], index: 4, kind: input, shape index: {}]
  %s5 = inlined_call_operand.vmem [shape: f32[1,384], index: 5, kind: input, shape index: {}]
  %s6 = inlined_call_operand.hbm [shape: bf16[128,512], index: 6, kind: input, shape index: {}]
  %s7 = inlined_call_operand.vmem [shape: f32[1,512], index: 7, kind: input, shape index: {}]
  %s8 = inlined_call_operand.hbm [shape: f32[128,128], index: 8, kind: output, shape index: {}]
  %s9 = sld [smem:[#allocation0]]
  $region89: #{tpu_custom_call.1} parent=0
    _
  %s11 = ssub.s32 1, %s9
  %s12 = scalar_select 0, %s11, %s9
  $region1: #{tpu_custom_call.1} parent=0
    #allocation2 [shape = 'u8[16384]{0}', space=vmem, size = 0x4000, scoped, tag = 'input window, operand 0']
    #allocation3 [shape = 's32[2]{0}', space=sflag, size = 0x8, scoped, tag = 'scoped memory for tpu_custom_call.1']
    #allocation4 [shape = 's32[2]{0}', space=sflag, size = 0x8, scoped, tag = 'scoped memory for tpu_custom_call.1']
    #allocation5 [shape = 'u8[65536]{0}', space=vmem, size = 0x10000, scoped, tag = 'input window, operand 1']
    #allocation6 [shape = 's32[2]{0}', space=sflag, size = 0x8, scoped, tag = 'scoped memory for tpu_custom_call.1']
    #allocation7 [shape = 'u8[512]{0}', space=vmem, size = 0x400, scoped, tag = 'input window, operand 2, single buffered']
    #allocation8 [shape = 'u8[32768]{0}', space=vmem, size = 0x8000, scoped, tag = 'input window, operand 3, single buffered']
    #allocation9 [shape = 's32[1]{0}', space=sflag, size = 0x4, scoped, tag = 'scoped memory for tpu_custom_call.1']
    #allocation10 [shape = 'u8[98304]{0}', space=vmem, size = 0x18000, scoped, tag = 'input window, operand 4, single buffered']
    #allocation11 [shape = 'u8[131072]{0}', space=vmem, size = 0x20000, scoped, tag = 'input window, operand 6, single buffered']
    #allocation12 [shape = 's32[1]{0}', space=sflag, size = 0x4, scoped, tag = 'scoped memory for tpu_custom_call.1']
    #allocation13 [shape = 'u8[65536]{0}', space=vmem, size = 0x10000, scoped, tag = 'output window, operand 0']
    %13 = vsyncpa [#allocation3], 0
    %s14 = scalar_lea.sflag [#allocation3], 1
    %15 = vsyncpa %s14, 0
    %16 = vsyncpa [#allocation6], 0
    %s17 = scalar_lea.sflag [#allocation6], 1
    %18 = vsyncpa %s17, 0
    %19 = vsyncpa [#allocation9], 0
    %20 = vsyncpa [#allocation12], 0
    %21 = vsyncpa [#allocation4], 0
    %s22 = scalar_lea.sflag [#allocation4], 1
    %23 = vsyncpa %s22, 0
    loop: start=0, step=1, limit=4
    $region2: #{tpu_custom_call.1} parent=1 // loop_pre_header
      _
    $region3: #{tpu_custom_call.1} parent=1 // loop_header
      %s25 = sphi 0, %s29
      %p26 = scmp.ge.s32.totalorder %s25, 4
      %s35 = sphi 0, %s37
      %s38 = sphi 0, %s35
      %s39 = sphi 0, %s38
      %s55 = sphi 0, %s39
      %s61 = sphi 0, %s63
      %s64 = sphi 0, %s61
      %s65 = sphi 0, %s64
      %s81 = sphi 0, %s65
      %s85 = sphi 0, %s85
      %s87 = sphi 0, %s85
      %s88 = sphi 0, %s87
      %s102 = sphi 0, %s88
      %s106 = sphi 0, %s106
      %s108 = sphi 0, %s106
      %s109 = sphi 0, %s108
      %s123 = sphi 0, %s109
      %s127 = sphi 0, %s127
      %s129 = sphi 0, %s127
      %s130 = sphi 0, %s129
      %s144 = sphi 0, %s130
      %s148 = sphi 0, %s148
      %s150 = sphi 0, %s148
      %s151 = sphi 0, %s150
      %s165 = sphi 0, %s151
      %s169 = sphi 0, %s169
      %s171 = sphi 0, %s169
      %s172 = sphi 0, %s171
      %s186 = sphi 0, %s172
      %s190 = sphi 0, %s190
      %s192 = sphi 0, %s190
      %s193 = sphi 0, %s192
      %s207 = sphi 0, %s193
      %s213 = sphi 0, %s215
      %s216 = sphi 0, %s213
      %s217 = sphi 0, %s216
      %s233 = sphi 0, %s217
    $region4: #{tpu_custom_call.1} parent=1 // loop_header_branch
      %28 = sbr.rel (%p26) target = $region8
    $region5: #{tpu_custom_call.1} parent=1 // loop_body
      %s30 = ssub.s32 %s25, 1
      %s31 = ssub.s32 %s25, 2
      %s32 = sadd.s32 %s25, 1
      %s33 = ssub.s32 %s25, %s32
      %p34 = scmp.eq.s32.totalorder %s33, 0
      %s36 = sadd.s32 %s35, 1
      %s37 = scalar_select %p34, %s35, %s36
      %p40 = pneg %p34
      %p41 = scmp.eq.s32.totalorder %s25, 1
      %p42 = por %p40, %p41
      %p43 = scmp.ne.s32.totalorder %s35, %s38
      %p44 = scmp.eq.s32.totalorder %s25, 0
      %p45 = por %p43, %p44
      %p46 = scmp.ne.s32.totalorder %s35, %s38
      %p47 = scmp.eq.s32.totalorder %s30, 1
      %p48 = por %p46, %p47
      %p49 = scmp.ne.s32.totalorder %s38, %s39
      %p50 = scmp.eq.s32.totalorder %s30, 0
      %p51 = por %p49, %p50
      %p52 = scmp.ne.s32.totalorder %s38, %s39
      %p53 = scmp.eq.s32.totalorder %s31, 1
      %p54 = por %p52, %p53
      %p56 = scmp.ne.s32.totalorder %s39, %s55
      %p57 = scmp.eq.s32.totalorder %s31, 0
      %p58 = por %p56, %p57
      %s59 = ssub.s32 %s25, %s32
      %p60 = scmp.eq.s32.totalorder %s59, 0
      %s62 = sadd.s32 %s61, 1
      %s63 = scalar_select %p60, %s61, %s62
      %p66 = pneg %p60
      %p67 = scmp.eq.s32.totalorder %s25, 1
      %p68 = por %p66, %p67
      %p69 = scmp.ne.s32.totalorder %s61, %s64
      %p70 = scmp.eq.s32.totalorder %s25, 0
      %p71 = por %p69, %p70
      %p72 = scmp.ne.s32.totalorder %s61, %s64
      %p73 = scmp.eq.s32.totalorder %s30, 1
      %p74 = por %p72, %p73
      %p75 = scmp.ne.s32.totalorder %s64, %s65
      %p76 = scmp.eq.s32.totalorder %s30, 0
      %p77 = por %p75, %p76
      %p78 = scmp.ne.s32.totalorder %s64, %s65
      %p79 = scmp.eq.s32.totalorder %s31, 1
      %p80 = por %p78, %p79
      %p82 = scmp.ne.s32.totalorder %s65, %s81
      %p83 = scmp.eq.s32.totalorder %s31, 0
      %p84 = por %p82, %p83
      %s86 = sadd.s32 %s85, 1
      %p89 = scmp.eq.s32.totalorder %s25, 1
      %p90 = scmp.ne.s32.totalorder %s85, %s87
      %p91 = scmp.eq.s32.totalorder %s25, 0
      %p92 = por %p90, %p91
      %p93 = scmp.ne.s32.totalorder %s85, %s87
      %p94 = scmp.eq.s32.totalorder %s30, 1
      %p95 = por %p93, %p94
      %p96 = scmp.ne.s32.totalorder %s87, %s88
      %p97 = scmp.eq.s32.totalorder %s30, 0
      %p98 = por %p96, %p97
      %p99 = scmp.ne.s32.totalorder %s87, %s88
      %p100 = scmp.eq.s32.totalorder %s31, 1
      %p101 = por %p99, %p100
      %p103 = scmp.ne.s32.totalorder %s88, %s102
      %p104 = scmp.eq.s32.totalorder %s31, 0
      %p105 = por %p103, %p104
      %s107 = sadd.s32 %s106, 1
      %p110 = scmp.eq.s32.totalorder %s25, 1
      %p111 = scmp.ne.s32.totalorder %s106, %s108
      %p112 = scmp.eq.s32.totalorder %s25, 0
      %p113 = por %p111, %p112
      %p114 = scmp.ne.s32.totalorder %s106, %s108
      %p115 = scmp.eq.s32.totalorder %s30, 1
      %p116 = por %p114, %p115
      %p117 = scmp.ne.s32.totalorder %s108, %s109
      %p118 = scmp.eq.s32.totalorder %s30, 0
      %p119 = por %p117, %p118
      %p120 = scmp.ne.s32.totalorder %s108, %s109
      %p121 = scmp.eq.s32.totalorder %s31, 1
      %p122 = por %p120, %p121
      %p124 = scmp.ne.s32.totalorder %s109, %s123
      %p125 = scmp.eq.s32.totalorder %s31, 0
      %p126 = por %p124, %p125
      %s128 = sadd.s32 %s127, 1
      %p131 = scmp.eq.s32.totalorder %s25, 1
      %p132 = scmp.ne.s32.totalorder %s127, %s129
      %p133 = scmp.eq.s32.totalorder %s25, 0
      %p134 = por %p132, %p133
      %p135 = scmp.ne.s32.totalorder %s127, %s129
      %p136 = scmp.eq.s32.totalorder %s30, 1
      %p137 = por %p135, %p136
      %p138 = scmp.ne.s32.totalorder %s129, %s130
      %p139 = scmp.eq.s32.totalorder %s30, 0
      %p140 = por %p138, %p139
      %p141 = scmp.ne.s32.totalorder %s129, %s130
      %p142 = scmp.eq.s32.totalorder %s31, 1
      %p143 = por %p141, %p142
      %p145 = scmp.ne.s32.totalorder %s130, %s144
      %p146 = scmp.eq.s32.totalorder %s31, 0
      %p147 = por %p145, %p146
      %s149 = sadd.s32 %s148, 1
      %p152 = scmp.eq.s32.totalorder %s25, 1
      %p153 = scmp.ne.s32.totalorder %s148, %s150
      %p154 = scmp.eq.s32.totalorder %s25, 0
      %p155 = por %p153, %p154
      %p156 = scmp.ne.s32.totalorder %s148, %s150
      %p157 = scmp.eq.s32.totalorder %s30, 1
      %p158 = por %p156, %p157
      %p159 = scmp.ne.s32.totalorder %s150, %s151
      %p160 = scmp.eq.s32.totalorder %s30, 0
      %p161 = por %p159, %p160
      %p162 = scmp.ne.s32.totalorder %s150, %s151
      %p163 = scmp.eq.s32.totalorder %s31, 1
      %p164 = por %p162, %p163
      %p166 = scmp.ne.s32.totalorder %s151, %s165
      %p167 = scmp.eq.s32.totalorder %s31, 0
      %p168 = por %p166, %p167
      %s170 = sadd.s32 %s169, 1
      %p173 = scmp.eq.s32.totalorder %s25, 1
      %p174 = scmp.ne.s32.totalorder %s169, %s171
      %p175 = scmp.eq.s32.totalorder %s25, 0
      %p176 = por %p174, %p175
      %p177 = scmp.ne.s32.totalorder %s169, %s171
      %p178 = scmp.eq.s32.totalorder %s30, 1
      %p179 = por %p177, %p178
      %p180 = scmp.ne.s32.totalorder %s171, %s172
      %p181 = scmp.eq.s32.totalorder %s30, 0
      %p182 = por %p180, %p181
      %p183 = scmp.ne.s32.totalorder %s171, %s172
      %p184 = scmp.eq.s32.totalorder %s31, 1
      %p185 = por %p183, %p184
      %p187 = scmp.ne.s32.totalorder %s172, %s186
      %p188 = scmp.eq.s32.totalorder %s31, 0
      %p189 = por %p187, %p188
      %s191 = sadd.s32 %s190, 1
      %p194 = scmp.eq.s32.totalorder %s25, 1
      %p195 = scmp.ne.s32.totalorder %s190, %s192
      %p196 = scmp.eq.s32.totalorder %s25, 0
      %p197 = por %p195, %p196
      %p198 = scmp.ne.s32.totalorder %s190, %s192
      %p199 = scmp.eq.s32.totalorder %s30, 1
      %p200 = por %p198, %p199
      %p201 = scmp.ne.s32.totalorder %s192, %s193
      %p202 = scmp.eq.s32.totalorder %s30, 0
      %p203 = por %p201, %p202
      %p204 = scmp.ne.s32.totalorder %s192, %s193
      %p205 = scmp.eq.s32.totalorder %s31, 1
      %p206 = por %p204, %p205
      %p208 = scmp.ne.s32.totalorder %s193, %s207
      %p209 = scmp.eq.s32.totalorder %s31, 0
      %p210 = por %p208, %p209
      %s211 = ssub.s32 %s25, %s32
      %p212 = scmp.eq.s32.totalorder %s211, 0
      %s214 = sadd.s32 %s213, 1
      %s215 = scalar_select %p212, %s213, %s214
      %p218 = pneg %p212
      %p219 = scmp.eq.s32.totalorder %s25, 1
      %p220 = por %p218, %p219
      %p221 = scmp.ne.s32.totalorder %s213, %s216
      %p222 = scmp.eq.s32.totalorder %s25, 0
      %p223 = por %p221, %p222
      %p224 = scmp.ne.s32.totalorder %s213, %s216
      %p225 = scmp.eq.s32.totalorder %s30, 1
      %p226 = por %p224, %p225
      %p227 = scmp.ne.s32.totalorder %s216, %s217
      %p228 = scmp.eq.s32.totalorder %s30, 0
      %p229 = por %p227, %p228
      %p230 = scmp.ne.s32.totalorder %s216, %s217
      %p231 = scmp.eq.s32.totalorder %s31, 1
      %p232 = por %p230, %p231
      %p234 = scmp.ne.s32.totalorder %s217, %s233
      %p235 = scmp.eq.s32.totalorder %s31, 0
      %p236 = por %p234, %p235
      %p237 = scmp.le.s32.totalorder 1, %s25
      %p238 = scmp.lt.s32.totalorder %s25, 3
      %p239 = pnand %p237, %p238
      %p240 = pneg %p239
      // Predicated region
      $region9: #{tpu_custom_call.1} parent=5 // pred_check
        _
      $region10: #{tpu_custom_call.1} parent=5 // pred_check_branch
        %242 = sbr.rel (%p239) target = $region12
      $region11: #{tpu_custom_call.1} parent=5 // pred_region
        %s243 = ssub.s32 %s25, 1
        // Predicated region
        $region13: #{tpu_custom_call.1} parent=11 // pred_check
          %p244 = pneg %p98
        $region14: #{tpu_custom_call.1} parent=11 // pred_check_branch
          %246 = sbr.rel (%p244) target = $region16
        $region15: #{tpu_custom_call.1} parent=11 // pred_region
          %s248 = ssub.s32 16, 16
          %249 = vsyncadd [#allocation6], %s248
          %s251 = sshll.u32 [#allocation7], 4
          %s252 = int_to_ptr.vmem [resolvable:$true] %s251
          %254 = dma.hbm_to_vmem [thread:$0]  %s2, 16, %s252, [#allocation6]
        $region16: #{tpu_custom_call.1} parent=11 // pred_fallthru
          _
        // Predicated region
        $region17: #{tpu_custom_call.1} parent=11 // pred_check
          %p255 = pneg %p119
        $region18: #{tpu_custom_call.1} parent=11 // pred_check_branch
          %257 = sbr.rel (%p255) target = $region20
        $region19: #{tpu_custom_call.1} parent=11 // pred_region
          %s259 = ssub.s32 1024, 1024
          %260 = vsyncadd [#allocation9], %s259
          %s261 = sshll.u32 [#allocation8], 4
          %s262 = int_to_ptr.vmem [resolvable:$true] %s261
          %267 = dma.hbm_to_vmem [thread:$0]  %s3, 1024, %s262, [#allocation9], 64, 64, 4
        $region20: #{tpu_custom_call.1} parent=11 // pred_fallthru
          _
        // Predicated region
        $region21: #{tpu_custom_call.1} parent=11 // pred_check
          %p268 = pneg %p140
        $region22: #{tpu_custom_call.1} parent=11 // pred_check_branch
          %270 = sbr.rel (%p268) target = $region24
        $region23: #{tpu_custom_call.1} parent=11 // pred_region
          %s272 = ssub.s32 3072, 3072
          %273 = vsyncadd [#allocation9], %s272
          %s274 = sshll.u32 [#allocation10], 4
          %s275 = int_to_ptr.vmem [resolvable:$true] %s274
          %280 = dma.hbm_to_vmem [thread:$0]  %s4, 3072, %s275, [#allocation9], 192, 192, 12
        $region24: #{tpu_custom_call.1} parent=11 // pred_fallthru
          _
        // Predicated region
        $region25: #{tpu_custom_call.1} parent=11 // pred_check
          %p281 = pneg %p161
        $region26: #{tpu_custom_call.1} parent=11 // pred_check_branch
          %283 = sbr.rel (%p281) target = $region28
        $region27: #{tpu_custom_call.1} parent=11 // pred_region
          _
        $region28: #{tpu_custom_call.1} parent=11 // pred_fallthru
          _
        // Predicated region
        $region29: #{tpu_custom_call.1} parent=11 // pred_check
          %p284 = pneg %p182
        $region30: #{tpu_custom_call.1} parent=11 // pred_check_branch
          %286 = sbr.rel (%p284) target = $region32
        $region31: #{tpu_custom_call.1} parent=11 // pred_region
          %s288 = ssub.s32 4096, 4096
          %289 = vsyncadd [#allocation12], %s288
          %s290 = sshll.u32 [#allocation11], 4
          %s291 = int_to_ptr.vmem [resolvable:$true] %s290
          %296 = dma.hbm_to_vmem [thread:$0]  %s6, 4096, %s291, [#allocation12], 256, 256, 16
        $region32: #{tpu_custom_call.1} parent=11 // pred_fallthru
          _
        // Predicated region
        $region33: #{tpu_custom_call.1} parent=11 // pred_check
          %p297 = pneg %p203
        $region34: #{tpu_custom_call.1} parent=11 // pred_check_branch
          %299 = sbr.rel (%p297) target = $region36
        $region35: #{tpu_custom_call.1} parent=11 // pred_region
          _
        $region36: #{tpu_custom_call.1} parent=11 // pred_fallthru
          _
      $region12: #{tpu_custom_call.1} parent=5 // pred_fallthru
        _
      %p300 = scmp.lt.s32.totalorder %s25, 2
      // Predicated region
      $region37: #{tpu_custom_call.1} parent=5 // pred_check
        %p301 = pneg %p300
      $region38: #{tpu_custom_call.1} parent=5 // pred_check_branch
        %303 = sbr.rel (%p301) target = $region40
      $region39: #{tpu_custom_call.1} parent=5 // pred_region
        // Predicated region
        $region41: #{tpu_custom_call.1} parent=39 // pred_check
          %p304 = pneg %p45
        $region42: #{tpu_custom_call.1} parent=39 // pred_check_branch
          %306 = sbr.rel (%p304) target = $region44
        $region43: #{tpu_custom_call.1} parent=39 // pred_region
          %s307 = sand.u32 %s35, 1
          %s308 = scalar_lea.sflag [#allocation3], %s307
          %s309 = sand.u32 %s35, 1
          %s310 = smul.addr %s309, 16
          %s311 = scalar_lea.vmem [#allocation2], %s310
          %s312 = smul.u32 2, %s25
          %s314 = ssub.s32 256, 256
          %315 = vsyncadd %s308, %s314
          %s316 = smul.addr %s312, 128
          %s317 = scalar_lea.hbm %s0, %s316
          %s318 = sshll.u32 %s311, 4
          %s319 = int_to_ptr.vmem [resolvable:$true] %s318
          %324 = dma.hbm_to_vmem [thread:$0]  %s317, 256, %s319, %s308, 128, 128, 8
        $region44: #{tpu_custom_call.1} parent=39 // pred_fallthru
          _
        // Predicated region
        $region45: #{tpu_custom_call.1} parent=39 // pred_check
          %p325 = pneg %p71
        $region46: #{tpu_custom_call.1} parent=39 // pred_check_branch
          %327 = sbr.rel (%p325) target = $region48
        $region47: #{tpu_custom_call.1} parent=39 // pred_region
          %s328 = sand.u32 %s25, 1
          %s329 = scalar_lea.sflag [#allocation6], %s328
          %s330 = sand.u32 %s61, 1
          %s331 = smul.addr %s330, 64
          %s332 = scalar_lea.vmem [#allocation5], %s331
          %s333 = smul.u32 8, %s25
          %s335 = ssub.s32 1024, 1024
          %336 = vsyncadd %s329, %s335
          %s337 = smul.addr %s333, 128
          %s338 = scalar_lea.hbm %s1, %s337
          %s339 = sshll.u32 %s332, 4
          %s340 = int_to_ptr.vmem [resolvable:$true] %s339
          %345 = dma.hbm_to_vmem [thread:$0]  %s338, 1024, %s340, %s329, 128, 128, 8
        $region48: #{tpu_custom_call.1} parent=39 // pred_fallthru
          _
      $region40: #{tpu_custom_call.1} parent=5 // pred_fallthru
        _
      %p346 = scmp.le.s32.totalorder 1, %s25
      %p347 = scmp.lt.s32.totalorder %s25, 3
      %p348 = pnand %p346, %p347
      %p349 = pneg %p348
      // Predicated region
      $region49: #{tpu_custom_call.1} parent=5 // pred_check
        _
      $region50: #{tpu_custom_call.1} parent=5 // pred_check_branch
        %351 = sbr.rel (%p348) target = $region52
      $region51: #{tpu_custom_call.1} parent=5 // pred_region
        %s352 = ssub.s32 %s25, 1
        %s353 = sand.u32 %s38, 1
        %s354 = scalar_lea.sflag [#allocation3], %s353
        %s355 = sand.u32 %s38, 1
        %s356 = smul.addr %s355, 16
        %s357 = scalar_lea.vmem [#allocation2], %s356
        // Predicated region
        $region53: #{tpu_custom_call.1} parent=51 // pred_check
          %p358 = pneg %p51
        $region54: #{tpu_custom_call.1} parent=51 // pred_check_branch
          %360 = sbr.rel (%p358) target = $region56
        $region55: #{tpu_custom_call.1} parent=51 // pred_region
          %361 = dma.done %s354, 256
        $region56: #{tpu_custom_call.1} parent=51 // pred_fallthru
          _
        %s362 = sand.u32 %s30, 1
        %s363 = scalar_lea.sflag [#allocation6], %s362
        %s364 = sand.u32 %s64, 1
        %s365 = smul.addr %s364, 64
        %s366 = scalar_lea.vmem [#allocation5], %s365
        // Predicated region
        $region57: #{tpu_custom_call.1} parent=51 // pred_check
          %p367 = pneg %p77
        $region58: #{tpu_custom_call.1} parent=51 // pred_check_branch
          %369 = sbr.rel (%p367) target = $region60
        $region59: #{tpu_custom_call.1} parent=51 // pred_region
          %370 = dma.done %s363, 1024
        $region60: #{tpu_custom_call.1} parent=51 // pred_fallthru
          _
        // Predicated region
        $region61: #{tpu_custom_call.1} parent=51 // pred_check
          %p371 = pneg %p98
        $region62: #{tpu_custom_call.1} parent=51 // pred_check_branch
          %373 = sbr.rel (%p371) target = $region64
        $region63: #{tpu_custom_call.1} parent=51 // pred_region
          %374 = dma.done [#allocation6], 16
        $region64: #{tpu_custom_call.1} parent=51 // pred_fallthru
          _
        // Predicated region
        $region65: #{tpu_custom_call.1} parent=51 // pred_check
          %p375 = pneg %p119
        $region66: #{tpu_custom_call.1} parent=51 // pred_check_branch
          %377 = sbr.rel (%p375) target = $region68
        $region67: #{tpu_custom_call.1} parent=51 // pred_region
          %378 = dma.done [#allocation9], 1024
        $region68: #{tpu_custom_call.1} parent=51 // pred_fallthru
          _
        // Predicated region
        $region69: #{tpu_custom_call.1} parent=51 // pred_check
          %p379 = pneg %p140
        $region70: #{tpu_custom_call.1} parent=51 // pred_check_branch
          %381 = sbr.rel (%p379) target = $region72
        $region71: #{tpu_custom_call.1} parent=51 // pred_region
          %382 = dma.done [#allocation9], 3072
        $region72: #{tpu_custom_call.1} parent=51 // pred_fallthru
          _
        // Predicated region
        $region73: #{tpu_custom_call.1} parent=51 // pred_check
          %p383 = pneg %p182
        $region74: #{tpu_custom_call.1} parent=51 // pred_check_branch
          %385 = sbr.rel (%p383) target = $region76
        $region75: #{tpu_custom_call.1} parent=51 // pred_region
          %386 = dma.done [#allocation12], 4096
        $region76: #{tpu_custom_call.1} parent=51 // pred_fallthru
          _
        %s387 = sand.u32 %s38, 1
        %s388 = scalar_lea.sflag [#allocation3], %s387
        %s389 = sand.u32 %s38, 1
        %s390 = smul.addr %s389, 16
        %s391 = scalar_lea.vmem [#allocation2], %s390
        %p392 = pneg %p51
        %p393 = pneg %p48
        %s394 = sand.u32 %s30, 1
        %s395 = scalar_lea.sflag [#allocation6], %s394
        %s396 = sand.u32 %s64, 1
        %s397 = smul.addr %s396, 64
        %s398 = scalar_lea.vmem [#allocation5], %s397
        %p399 = pneg %p77
        %p400 = pneg %p74
        %p401 = pneg %p98
        %p402 = pneg %p95
        %p403 = pneg %p119
        %p404 = pneg %p116
        %p405 = pneg %p140
        %p406 = pneg %p137
        %p407 = pneg %p161
        %p408 = pneg %p158
        %p409 = pneg %p182
        %p410 = pneg %p179
        %p411 = pneg %p203
        %p412 = pneg %p200
        %p413 = pneg %p229
        %p414 = pneg %p226
        %s415 = sand.u32 %s216, 1
        %s416 = scalar_lea.sflag [#allocation4], %s415
        %s417 = sand.u32 %s216, 1
        %s418 = smul.addr %s417, 64
        %s419 = scalar_lea.vmem [#allocation13], %s418
        %s420 = smul.u32 2, %s30
        %s421 = smul.u32 8, %s30
        %s422 = smul.u32 8, %s30
        %v424 = vld [vmem:[%s366] sm:$0xff]
        %v425 = vld [vmem:[%s366 + $0x8] sm:$0xff]
        %v426 = vld [vmem:[%s366 + $0x10] sm:$0xff]
        %v427 = vld [vmem:[%s366 + $0x18] sm:$0xff]
        %v428 = vld [vmem:[%s366 + $0x20] sm:$0xff]
        %v429 = vld [vmem:[%s366 + $0x28] sm:$0xff]
        %v430 = vld [vmem:[%s366 + $0x30] sm:$0xff]
        %v431 = vld [vmem:[%s366 + $0x38] sm:$0xff]
        %v432 = vpack.c.bf16 %v425, %v424
        %v433 = vpack.c.bf16 %v427, %v426
        %v434 = vpack.c.bf16 %v429, %v428
        %v435 = vpack.c.bf16 %v431, %v430
        %v436 = vld [vmem:[#allocation11] sm:$0xff]
        %v437 = vld [vmem:[#allocation11 + $0x8] sm:$0xff]
        %v438 = vld [vmem:[#allocation11 + $0x10] sm:$0xff]
        %v439 = vld [vmem:[#allocation11 + $0x18] sm:$0xff]
        %v440 = vld [vmem:[#allocation11 + $0x20] sm:$0xff]
        %v441 = vld [vmem:[#allocation11 + $0x28] sm:$0xff]
        %v442 = vld [vmem:[#allocation11 + $0x30] sm:$0xff]
        %v443 = vld [vmem:[#allocation11 + $0x38] sm:$0xff]
        %v444 = vld [vmem:[#allocation11 + $0x40] sm:$0xff]
        %v445 = vld [vmem:[#allocation11 + $0x48] sm:$0xff]
        %v446 = vld [vmem:[#allocation11 + $0x50] sm:$0xff]
        %v447 = vld [vmem:[#allocation11 + $0x58] sm:$0xff]
        %v448 = vld [vmem:[#allocation11 + $0x60] sm:$0xff]
        %v449 = vld [vmem:[#allocation11 + $0x68] sm:$0xff]
        %v450 = vld [vmem:[#allocation11 + $0x70] sm:$0xff]
        %v451 = vld [vmem:[#allocation11 + $0x78] sm:$0xff]
        %v452 = vld [vmem:[#allocation11 + $0x80] sm:$0xff]
        %v453 = vld [vmem:[#allocation11 + $0x88] sm:$0xff]
        %v454 = vld [vmem:[#allocation11 + $0x90] sm:$0xff]
        %v455 = vld [vmem:[#allocation11 + $0x98] sm:$0xff]
        %v456 = vld [vmem:[#allocation11 + $0xa0] sm:$0xff]
        %v457 = vld [vmem:[#allocation11 + $0xa8] sm:$0xff]
        %v458 = vld [vmem:[#allocation11 + $0xb0] sm:$0xff]
        %v459 = vld [vmem:[#allocation11 + $0xb8] sm:$0xff]
        %v460 = vld [vmem:[#allocation11 + $0xc0] sm:$0xff]
        %v461 = vld [vmem:[#allocation11 + $0xc8] sm:$0xff]
        %v462 = vld [vmem:[#allocation11 + $0xd0] sm:$0xff]
        %v463 = vld [vmem:[#allocation11 + $0xd8] sm:$0xff]
        %v464 = vld [vmem:[#allocation11 + $0xe0] sm:$0xff]
        %v465 = vld [vmem:[#allocation11 + $0xe8] sm:$0xff]
        %v466 = vld [vmem:[#allocation11 + $0xf0] sm:$0xff]
        %v467 = vld [vmem:[#allocation11 + $0xf8] sm:$0xff]
        %v468 = vld [vmem:[%s7] sm:$0xf]
        %v470 = vlaneseq
        %v471 = vshrl.u32 %v470, 7
        %v472 = vsub.s32 0, %v471
        %v473 = vrot.slane %v468, %v472
        %v474 = vlaneseq
        %v475 = vshrl.u32 %v474, 7
        %v476 = vsub.s32 1, %v475
        %v477 = vrot.slane %v468, %v476
        %v478 = vlaneseq
        %v479 = vshrl.u32 %v478, 7
        %v480 = vsub.s32 2, %v479
        %v481 = vrot.slane %v468, %v480
        %v482 = vlaneseq
        %v483 = vshrl.u32 %v482, 7
        %v484 = vsub.s32 3, %v483
        %v485 = vrot.slane %v468, %v484
        %v522 = vunpack.c.l.b16 %v436
        %v523 = vunpack.c.h.b16 %v436
        %v524 = vunpack.c.l.b16 %v437
        %v525 = vunpack.c.h.b16 %v437
        %v526 = vunpack.c.l.b16 %v438
        %v527 = vunpack.c.h.b16 %v438
        %v528 = vunpack.c.l.b16 %v439
        %v529 = vunpack.c.h.b16 %v439
        %v530 = vunpack.c.l.b16 %v440
        %v531 = vunpack.c.h.b16 %v440
        %v532 = vunpack.c.l.b16 %v441
        %v533 = vunpack.c.h.b16 %v441
        %v534 = vunpack.c.l.b16 %v442
        %v535 = vunpack.c.h.b16 %v442
        %v536 = vunpack.c.l.b16 %v443
        %v537 = vunpack.c.h.b16 %v443
        %v538 = vunpack.c.l.b16 %v444
        %v539 = vunpack.c.h.b16 %v444
        %v540 = vunpack.c.l.b16 %v445
        %v541 = vunpack.c.h.b16 %v445
        %v542 = vunpack.c.l.b16 %v446
        %v543 = vunpack.c.h.b16 %v446
        %v544 = vunpack.c.l.b16 %v447
        %v545 = vunpack.c.h.b16 %v447
        %v546 = vunpack.c.l.b16 %v448
        %v547 = vunpack.c.h.b16 %v448
        %v548 = vunpack.c.l.b16 %v449
        %v549 = vunpack.c.h.b16 %v449
        %v550 = vunpack.c.l.b16 %v450
        %v551 = vunpack.c.h.b16 %v450
        %v552 = vunpack.c.l.b16 %v451
        %v553 = vunpack.c.h.b16 %v451
        %v554 = vunpack.c.l.b16 %v452
        %v555 = vunpack.c.h.b16 %v452
        %v556 = vunpack.c.l.b16 %v453
        %v557 = vunpack.c.h.b16 %v453
        %v558 = vunpack.c.l.b16 %v454
        %v559 = vunpack.c.h.b16 %v454
        %v560 = vunpack.c.l.b16 %v455
        %v561 = vunpack.c.h.b16 %v455
        %v562 = vunpack.c.l.b16 %v456
        %v563 = vunpack.c.h.b16 %v456
        %v564 = vunpack.c.l.b16 %v457
        %v565 = vunpack.c.h.b16 %v457
        %v566 = vunpack.c.l.b16 %v458
        %v567 = vunpack.c.h.b16 %v458
        %v568 = vunpack.c.l.b16 %v459
        %v569 = vunpack.c.h.b16 %v459
        %v570 = vunpack.c.l.b16 %v460
        %v571 = vunpack.c.h.b16 %v460
        %v572 = vunpack.c.l.b16 %v461
        %v573 = vunpack.c.h.b16 %v461
        %v574 = vunpack.c.l.b16 %v462
        %v575 = vunpack.c.h.b16 %v462
        %v576 = vunpack.c.l.b16 %v463
        %v577 = vunpack.c.h.b16 %v463
        %v578 = vunpack.c.l.b16 %v464
        %v579 = vunpack.c.h.b16 %v464
        %v580 = vunpack.c.l.b16 %v465
        %v581 = vunpack.c.h.b16 %v465
        %v582 = vunpack.c.l.b16 %v466
        %v583 = vunpack.c.h.b16 %v466
        %v584 = vunpack.c.l.b16 %v467
        %v585 = vunpack.c.h.b16 %v467
        %v586 = vpack.c.b16 %v526, %v522
        %v587 = vpack.c.b16 %v527, %v523
        %v588 = vpack.c.b16 %v528, %v524
        %v589 = vpack.c.b16 %v529, %v525
        %v590 = vpack.c.b16 %v534, %v530
        %v591 = vpack.c.b16 %v535, %v531
        %v592 = vpack.c.b16 %v536, %v532
        %v593 = vpack.c.b16 %v537, %v533
        %v594 = vpack.c.b16 %v542, %v538
        %v595 = vpack.c.b16 %v543, %v539
        %v596 = vpack.c.b16 %v544, %v540
        %v597 = vpack.c.b16 %v545, %v541
        %v598 = vpack.c.b16 %v550, %v546
        %v599 = vpack.c.b16 %v551, %v547
        %v600 = vpack.c.b16 %v552, %v548
        %v601 = vpack.c.b16 %v553, %v549
        %v602 = vpack.c.b16 %v558, %v554
        %v603 = vpack.c.b16 %v559, %v555
        %v604 = vpack.c.b16 %v560, %v556
        %v605 = vpack.c.b16 %v561, %v557
        %v606 = vpack.c.b16 %v566, %v562
        %v607 = vpack.c.b16 %v567, %v563
        %v608 = vpack.c.b16 %v568, %v564
        %v609 = vpack.c.b16 %v569, %v565
        %v610 = vpack.c.b16 %v574, %v570
        %v611 = vpack.c.b16 %v575, %v571
        %v612 = vpack.c.b16 %v576, %v572
        %v613 = vpack.c.b16 %v577, %v573
        %v614 = vpack.c.b16 %v582, %v578
        %v615 = vpack.c.b16 %v583, %v579
        %v616 = vpack.c.b16 %v584, %v580
        %v617 = vpack.c.b16 %v585, %v581
        %650 = vmatprep.subr.bf16.mxu0 %v587
        %651 = vmatpush1.bf16.msra.mxu0 %v586
        %652 = vmatprep.subr.bf16.mxu0 %v591
        %653 = vmatpush1.bf16.msra.mxu0 %v590
        %654 = vmatprep.subr.bf16.mxu0 %v595
        %655 = vmatpush1.bf16.msra.mxu0 %v594
        %656 = vmatprep.subr.bf16.mxu0 %v599
        %657 = vmatpush1.bf16.msra.mxu0 %v598
        %658 = vmatprep.subr.bf16.mxu0 %v603
        %659 = vmatpush1.bf16.msra.mxu0 %v602
        %660 = vmatprep.subr.bf16.mxu0 %v607
        %661 = vmatpush1.bf16.msra.mxu0 %v606
        %662 = vmatprep.subr.bf16.mxu0 %v611
        %663 = vmatpush1.bf16.msra.mxu0 %v610
        %664 = vmatprep.subr.bf16.mxu0 %v615
        %665 = vmatpush1.bf16.msra.mxu0 %v614
        %666 = vmatprep.subr.bf16.mxu0 0
        %667 = vmatpush1.bf16.msra.mxu0 0
        %668 = vmatprep.subr.bf16.mxu0 0
        %669 = vmatpush1.bf16.msra.mxu0 0
        %670 = vmatprep.subr.bf16.mxu0 0
        %671 = vmatpush1.bf16.msra.mxu0 0
        %672 = vmatprep.subr.bf16.mxu0 0
        %673 = vmatpush1.bf16.msra.mxu0 0
        %674 = vmatprep.subr.bf16.mxu0 0
        %675 = vmatpush1.bf16.msra.mxu0 0
        %676 = vmatprep.subr.bf16.mxu0 0
        %677 = vmatpush1.bf16.msra.mxu0 0
        %678 = vmatprep.subr.bf16.mxu0 0
        %679 = vmatpush1.bf16.msra.mxu0 0
        %680 = vmatprep.subr.bf16.mxu0 0
        %681 = vmatpush1.bf16.msra.mxu0 0
        %682 = vmatprep.mubr.bf16.mxu0 0
        %683 = vmatmul.mubr.bf16.gmra.mrb[0].mxu0 %v432
        %v684 = vpop.f32.mrb[0].mxu0
        %v685 = vadd.f32 %v473, %v684
        %v686 = vpop.f32.mrb[0].mxu0
        %v687 = vadd.f32 %v477, %v686
        %v688 = vpop.f32.mrb[0].mxu0
        %v689 = vadd.f32 %v473, %v688
        %v690 = vpop.f32.mrb[0].mxu0
        %v691 = vadd.f32 %v477, %v690
        %692 = vmatprep.mubr.bf16.mxu0 0
        %693 = vmatmul.mubr.bf16.gmra.mrb[0].mxu0 %v433
        %v694 = vpop.f32.mrb[0].mxu0
        %v695 = vadd.f32 %v473, %v694
        %v696 = vpop.f32.mrb[0].mxu0
        %v697 = vadd.f32 %v477, %v696
        %v698 = vpop.f32.mrb[0].mxu0
        %v699 = vadd.f32 %v473, %v698
        %v700 = vpop.f32.mrb[0].mxu0
        %v701 = vadd.f32 %v477, %v700
        %702 = vmatprep.mubr.bf16.mxu0 0
        %703 = vmatmul.mubr.bf16.gmra.mrb[0].mxu0 %v434
        %v704 = vpop.f32.mrb[0].mxu0
        %v705 = vadd.f32 %v473, %v704
        %v706 = vpop.f32.mrb[0].mxu0
        %v707 = vadd.f32 %v477, %v706
        %v708 = vpop.f32.mrb[0].mxu0
        %v709 = vadd.f32 %v473, %v708
        %v710 = vpop.f32.mrb[0].mxu0
        %v711 = vadd.f32 %v477, %v710
        %712 = vmatprep.mubr.bf16.mxu0 0
        %713 = vmatmul.mubr.bf16.gmra.mrb[0].mxu0 %v435
        %v714 = vpop.f32.mrb[0].mxu0
        %v715 = vadd.f32 %v473, %v714
        %v716 = vpop.f32.mrb[0].mxu0
        %v717 = vadd.f32 %v477, %v716
        %v718 = vpop.f32.mrb[0].mxu0
        %v719 = vadd.f32 %v473, %v718
        %v720 = vpop.f32.mrb[0].mxu0
        %v721 = vadd.f32 %v477, %v720
        %722 = vdwg.mxu0
        %723 = vmatprep.subr.bf16.mxu0 %v589
        %724 = vmatpush1.bf16.msra.mxu0 %v588
        %725 = vmatprep.subr.bf16.mxu0 %v593
        %726 = vmatpush1.bf16.msra.mxu0 %v592
        %727 = vmatprep.subr.bf16.mxu0 %v597
        %728 = vmatpush1.bf16.msra.mxu0 %v596
        %729 = vmatprep.subr.bf16.mxu0 %v601
        %730 = vmatpush1.bf16.msra.mxu0 %v600
        %731 = vmatprep.subr.bf16.mxu0 %v605
        %732 = vmatpush1.bf16.msra.mxu0 %v604
        %733 = vmatprep.subr.bf16.mxu0 %v609
        %734 = vmatpush1.bf16.msra.mxu0 %v608
        %735 = vmatprep.subr.bf16.mxu0 %v613
        %736 = vmatpush1.bf16.msra.mxu0 %v612
        %737 = vmatprep.subr.bf16.mxu0 %v617
        %738 = vmatpush1.bf16.msra.mxu0 %v616
        %739 = vmatprep.subr.bf16.mxu0 0
        %740 = vmatpush1.bf16.msra.mxu0 0
        %741 = vmatprep.subr.bf16.mxu0 0
        %742 = vmatpush1.bf16.msra.mxu0 0
        %743 = vmatprep.subr.bf16.mxu0 0
        %744 = vmatpush1.bf16.msra.mxu0 0
        %745 = vmatprep.subr.bf16.mxu0 0
        %746 = vmatpush1.bf16.msra.mxu0 0
        %747 = vmatprep.subr.bf16.mxu0 0
        %748 = vmatpush1.bf16.msra.mxu0 0
        %749 = vmatprep.subr.bf16.mxu0 0
        %750 = vmatpush1.bf16.msra.mxu0 0
        %751 = vmatprep.subr.bf16.mxu0 0
        %752 = vmatpush1.bf16.msra.mxu0 0
        %753 = vmatprep.subr.bf16.mxu0 0
        %754 = vmatpush1.bf16.msra.mxu0 0
        %755 = vmatprep.mubr.bf16.mxu0 0
        %756 = vmatmul.mubr.bf16.gmra.mrb[0].mxu0 %v432
        %v757 = vpop.f32.mrb[0].mxu0
        %v758 = vadd.f32 %v481, %v757
        %v759 = vpop.f32.mrb[0].mxu0
        %v760 = vadd.f32 %v485, %v759
        %v761 = vpop.f32.mrb[0].mxu0
        %v762 = vadd.f32 %v481, %v761
        %v763 = vpop.f32.mrb[0].mxu0
        %v764 = vadd.f32 %v485, %v763
        %765 = vmatprep.mubr.bf16.mxu0 0
        %766 = vmatmul.mubr.bf16.gmra.mrb[0].mxu0 %v433
        %v767 = vpop.f32.mrb[0].mxu0
        %v768 = vadd.f32 %v481, %v767
        %v769 = vpop.f32.mrb[0].mxu0
        %v770 = vadd.f32 %v485, %v769
        %v771 = vpop.f32.mrb[0].mxu0
        %v772 = vadd.f32 %v481, %v771
        %v773 = vpop.f32.mrb[0].mxu0
        %v774 = vadd.f32 %v485, %v773
        %775 = vmatprep.mubr.bf16.mxu0 0
        %776 = vmatmul.mubr.bf16.gmra.mrb[0].mxu0 %v434
        %v777 = vpop.f32.mrb[0].mxu0
        %v778 = vadd.f32 %v481, %v777
        %v779 = vpop.f32.mrb[0].mxu0
        %v780 = vadd.f32 %v485, %v779
        %v781 = vpop.f32.mrb[0].mxu0
        %v782 = vadd.f32 %v481, %v781
        %v783 = vpop.f32.mrb[0].mxu0
        %v784 = vadd.f32 %v485, %v783
        %785 = vmatprep.mubr.bf16.mxu0 0
        %786 = vmatmul.mubr.bf16.gmra.mrb[0].mxu0 %v435
        %v787 = vpop.f32.mrb[0].mxu0
        %v788 = vadd.f32 %v481, %v787
        %v789 = vpop.f32.mrb[0].mxu0
        %v790 = vadd.f32 %v485, %v789
        %v791 = vpop.f32.mrb[0].mxu0
        %v792 = vadd.f32 %v481, %v791
        %v793 = vpop.f32.mrb[0].mxu0
        %v794 = vadd.f32 %v485, %v793
        %795 = vdwg.mxu0
        %v796 = vld [vmem:[#allocation7] sm:$0x1]
        %798 = vset.pattern.permute.xlu0 0
        %799 = vperm.xlu0 %798, %v760
        %v800 = vpop.permute.xlu0 %799
        %803 = vset.pattern.permute.xlu0 0
        %804 = vperm.xlu0 %803, %v764
        %v805 = vpop.permute.xlu0 %804
        %808 = vset.pattern.permute.xlu0 0
        %809 = vperm.xlu0 %808, %v770
        %v810 = vpop.permute.xlu0 %809
        %813 = vset.pattern.permute.xlu0 0
        %814 = vperm.xlu0 %813, %v774
        %v815 = vpop.permute.xlu0 %814
        %818 = vset.pattern.permute.xlu0 0
        %819 = vperm.xlu0 %818, %v780
        %v820 = vpop.permute.xlu0 %819
        %823 = vset.pattern.permute.xlu0 0
        %824 = vperm.xlu0 %823, %v784
        %v825 = vpop.permute.xlu0 %824
        %828 = vset.pattern.permute.xlu0 0
        %829 = vperm.xlu0 %828, %v790
        %v830 = vpop.permute.xlu0 %829
        %833 = vset.pattern.permute.xlu0 0
        %834 = vperm.xlu0 %833, %v794
        %v835 = vpop.permute.xlu0 %834
        %v838 = vlaneseq
        %v839 = vshrl.u32 %v838, 7
        %v840 = vsub.s32 0, %v839
        %v841 = vrot.slane %v796, %v840
        %v843 = vadd.f32 %v800, %v841
        %v844 = vadd.f32 %v805, %v841
        %v845 = vadd.f32 %v810, %v841
        %v846 = vadd.f32 %v815, %v841
        %v847 = vadd.f32 %v820, %v841
        %v848 = vadd.f32 %v825, %v841
        %v849 = vadd.f32 %v830, %v841
        %v850 = vadd.f32 %v835, %v841
        %vm851 = vcmp.ge.f32.partialorder %v843, 0.0
        %vm852 = vcmp.ge.f32.partialorder %v844, 0.0
        %vm853 = vcmp.ge.f32.partialorder %v845, 0.0
        %vm854 = vcmp.ge.f32.partialorder %v846, 0.0
        %vm855 = vcmp.ge.f32.partialorder %v847, 0.0
        %vm856 = vcmp.ge.f32.partialorder %v848, 0.0
        %vm857 = vcmp.ge.f32.partialorder %v849, 0.0
        %vm858 = vcmp.ge.f32.partialorder %v850, 0.0
        %v859 = vmul.f32 %v843, 0.01
        %v860 = vmul.f32 %v844, 0.01
        %v861 = vmul.f32 %v845, 0.01
        %v862 = vmul.f32 %v846, 0.01
        %v863 = vmul.f32 %v847, 0.01
        %v864 = vmul.f32 %v848, 0.01
        %v865 = vmul.f32 %v849, 0.01
        %v866 = vmul.f32 %v850, 0.01
        %v867 = vsel %vm851, %v843, %v859
        %v868 = vsel %vm852, %v844, %v860
        %v869 = vsel %vm853, %v845, %v861
        %v870 = vsel %vm854, %v846, %v862
        %v871 = vsel %vm855, %v847, %v863
        %v872 = vsel %vm856, %v848, %v864
        %v873 = vsel %vm857, %v849, %v865
        %v874 = vsel %vm858, %v850, %v866
        %v875 = vld [vmem:[%s357] sm:$0xff]
        %v876 = vld [vmem:[%s357 + $0x8] sm:$0xff]
        %v877 = vunpack.c.0.s8 %v875
        %v878 = vunpack.c.1.s8 %v875
        %v879 = vunpack.c.2.s8 %v875
        %v880 = vunpack.c.3.s8 %v875
        %v881 = vunpack.c.0.s8 %v876
        %v882 = vunpack.c.1.s8 %v876
        %v883 = vunpack.c.2.s8 %v876
        %v884 = vunpack.c.3.s8 %v876
        %v885 = vcvt.s32.f32 %v877
        %v886 = vcvt.s32.f32 %v878
        %v887 = vcvt.s32.f32 %v879
        %v888 = vcvt.s32.f32 %v880
        %v889 = vcvt.s32.f32 %v881
        %v890 = vcvt.s32.f32 %v882
        %v891 = vcvt.s32.f32 %v883
        %v892 = vcvt.s32.f32 %v884
        %vm893 = vcmp.gt.f32.partialorder %v885, 0.0
        %vm894 = vcmp.gt.f32.partialorder %v886, 0.0
        %vm895 = vcmp.gt.f32.partialorder %v887, 0.0
        %vm896 = vcmp.gt.f32.partialorder %v888, 0.0
        %vm897 = vcmp.gt.f32.partialorder %v889, 0.0
        %vm898 = vcmp.gt.f32.partialorder %v890, 0.0
        %vm899 = vcmp.gt.f32.partialorder %v891, 0.0
        %vm900 = vcmp.gt.f32.partialorder %v892, 0.0
        %v901 = vsel %vm893, %v867, -1e+30
        %v902 = vsel %vm894, %v868, -1e+30
        %v903 = vsel %vm895, %v869, -1e+30
        %v904 = vsel %vm896, %v870, -1e+30
        %v905 = vsel %vm897, %v871, -1e+30
        %v906 = vsel %vm898, %v872, -1e+30
        %v907 = vsel %vm899, %v873, -1e+30
        %v908 = vsel %vm900, %v874, -1e+30
        %909 = vmax.xlane.f32.xlu0 %v901
        %v910 = vpop.xlane.xlu0 %909
        %911 = vmax.xlane.f32.xlu0 %v902
        %v912 = vpop.xlane.xlu0 %911
        %913 = vmax.xlane.f32.xlu0 %v903
        %v914 = vpop.xlane.xlu0 %913
        %915 = vmax.xlane.f32.xlu0 %v904
        %v916 = vpop.xlane.xlu0 %915
        %917 = vmax.xlane.f32.xlu0 %v905
        %v918 = vpop.xlane.xlu0 %917
        %919 = vmax.xlane.f32.xlu0 %v906
        %v920 = vpop.xlane.xlu0 %919
        %921 = vmax.xlane.f32.xlu0 %v907
        %v922 = vpop.xlane.xlu0 %921
        %923 = vmax.xlane.f32.xlu0 %v908
        %v924 = vpop.xlane.xlu0 %923
        %v925 = vsub.f32 %v901, %v910
        %v926 = vsub.f32 %v902, %v912
        %v927 = vsub.f32 %v903, %v914
        %v928 = vsub.f32 %v904, %v916
        %v929 = vsub.f32 %v905, %v918
        %v930 = vsub.f32 %v906, %v920
        %v931 = vsub.f32 %v907, %v922
        %v932 = vsub.f32 %v908, %v924
        %v933 = vmul.f32 %v925, 1.442695
        %v934 = vpow.pop %v933
        %v935 = vmul.f32 %v926, 1.442695
        %v936 = vpow.pop %v935
        %v937 = vmul.f32 %v927, 1.442695
        %v938 = vpow.pop %v937
        %v939 = vmul.f32 %v928, 1.442695
        %v940 = vpow.pop %v939
        %v941 = vmul.f32 %v929, 1.442695
        %v942 = vpow.pop %v941
        %v943 = vmul.f32 %v930, 1.442695
        %v944 = vpow.pop %v943
        %v945 = vmul.f32 %v931, 1.442695
        %v946 = vpow.pop %v945
        %v947 = vmul.f32 %v932, 1.442695
        %v948 = vpow.pop %v947
        %v949 = vsel %vm893, %v934, 0.0
        %v950 = vsel %vm894, %v936, 0.0
        %v951 = vsel %vm895, %v938, 0.0
        %v952 = vsel %vm896, %v940, 0.0
        %v953 = vsel %vm897, %v942, 0.0
        %v954 = vsel %vm898, %v944, 0.0
        %v955 = vsel %vm899, %v946, 0.0
        %v956 = vsel %vm900, %v948, 0.0
        %957 = vadd.xlane.f32.xlu0 %v949
        %v958 = vpop.xlane.xlu0 %957
        %959 = vadd.xlane.f32.xlu0 %v950
        %v960 = vpop.xlane.xlu0 %959
        %961 = vadd.xlane.f32.xlu0 %v951
        %v962 = vpop.xlane.xlu0 %961
        %963 = vadd.xlane.f32.xlu0 %v952
        %v964 = vpop.xlane.xlu0 %963
        %965 = vadd.xlane.f32.xlu0 %v953
        %v966 = vpop.xlane.xlu0 %965
        %967 = vadd.xlane.f32.xlu0 %v954
        %v968 = vpop.xlane.xlu0 %967
        %969 = vadd.xlane.f32.xlu0 %v955
        %v970 = vpop.xlane.xlu0 %969
        %971 = vadd.xlane.f32.xlu0 %v956
        %v972 = vpop.xlane.xlu0 %971
        %v973 = vpack.c.bf16 %v950, %v949
        %v974 = vpack.c.bf16 %v952, %v951
        %v975 = vpack.c.bf16 %v954, %v953
        %v976 = vpack.c.bf16 %v956, %v955
        %v977 = vld [vmem:[#allocation8] sm:$0xf]
        %v978 = vld [vmem:[#allocation8 + $0x4] sm:$0xf]
        %v979 = vld [vmem:[#allocation8 + $0x8] sm:$0xf]
        %v980 = vld [vmem:[#allocation8 + $0xc] sm:$0xf]
        %v981 = vld [vmem:[#allocation8 + $0x10] sm:$0xf]
        %v982 = vld [vmem:[#allocation8 + $0x14] sm:$0xf]
        %v983 = vld [vmem:[#allocation8 + $0x18] sm:$0xf]
        %v984 = vld [vmem:[#allocation8 + $0x1c] sm:$0xf]
        %v985 = vld [vmem:[#allocation8 + $0x20] sm:$0xf]
        %v986 = vld [vmem:[#allocation8 + $0x24] sm:$0xf]
        %v987 = vld [vmem:[#allocation8 + $0x28] sm:$0xf]
        %v988 = vld [vmem:[#allocation8 + $0x2c] sm:$0xf]
        %v989 = vld [vmem:[#allocation8 + $0x30] sm:$0xf]
        %v990 = vld [vmem:[#allocation8 + $0x34] sm:$0xf]
        %v991 = vld [vmem:[#allocation8 + $0x38] sm:$0xf]
        %v992 = vld [vmem:[#allocation8 + $0x3c] sm:$0xf]
        %v1009 = vunpack.c.l.b16 %v977
        %v1010 = vunpack.c.l.b16 %v978
        %v1011 = vunpack.c.l.b16 %v979
        %v1012 = vunpack.c.l.b16 %v980
        %v1013 = vunpack.c.l.b16 %v981
        %v1014 = vunpack.c.l.b16 %v982
        %v1015 = vunpack.c.l.b16 %v983
        %v1016 = vunpack.c.l.b16 %v984
        %v1017 = vunpack.c.l.b16 %v985
        %v1018 = vunpack.c.l.b16 %v986
        %v1019 = vunpack.c.l.b16 %v987
        %v1020 = vunpack.c.l.b16 %v988
        %v1021 = vunpack.c.l.b16 %v989
        %v1022 = vunpack.c.l.b16 %v990
        %v1023 = vunpack.c.l.b16 %v991
        %v1024 = vunpack.c.l.b16 %v992
        %v1025 = vpack.c.b16 %v1010, %v1009
        %v1026 = vpack.c.b16 %v1012, %v1011
        %v1027 = vpack.c.b16 %v1014, %v1013
        %v1028 = vpack.c.b16 %v1016, %v1015
        %v1029 = vpack.c.b16 %v1018, %v1017
        %v1030 = vpack.c.b16 %v1020, %v1019
        %v1031 = vpack.c.b16 %v1022, %v1021
        %v1032 = vpack.c.b16 %v1024, %v1023
        %1041 = vmatprep.subr.bf16.mxu0 0
        %1042 = vmatpush1.bf16.msra.mxu0 %v1025
        %1043 = vmatprep.subr.bf16.mxu0 0
        %1044 = vmatpush1.bf16.msra.mxu0 %v1026
        %1045 = vmatprep.subr.bf16.mxu0 0
        %1046 = vmatpush1.bf16.msra.mxu0 %v1027
        %1047 = vmatprep.subr.bf16.mxu0 0
        %1048 = vmatpush1.bf16.msra.mxu0 %v1028
        %1049 = vmatprep.subr.bf16.mxu0 0
        %1050 = vmatpush1.bf16.msra.mxu0 %v1029
        %1051 = vmatprep.subr.bf16.mxu0 0
        %1052 = vmatpush1.bf16.msra.mxu0 %v1030
        %1053 = vmatprep.subr.bf16.mxu0 0
        %1054 = vmatpush1.bf16.msra.mxu0 %v1031
        %1055 = vmatprep.subr.bf16.mxu0 0
        %1056 = vmatpush1.bf16.msra.mxu0 %v1032
        %1057 = vmatprep.subr.bf16.mxu0 0
        %1058 = vmatpush1.bf16.msra.mxu0 0
        %1059 = vmatprep.subr.bf16.mxu0 0
        %1060 = vmatpush1.bf16.msra.mxu0 0
        %1061 = vmatprep.subr.bf16.mxu0 0
        %1062 = vmatpush1.bf16.msra.mxu0 0
        %1063 = vmatprep.subr.bf16.mxu0 0
        %1064 = vmatpush1.bf16.msra.mxu0 0
        %1065 = vmatprep.subr.bf16.mxu0 0
        %1066 = vmatpush1.bf16.msra.mxu0 0
        %1067 = vmatprep.subr.bf16.mxu0 0
        %1068 = vmatpush1.bf16.msra.mxu0 0
        %1069 = vmatprep.subr.bf16.mxu0 0
        %1070 = vmatpush1.bf16.msra.mxu0 0
        %1071 = vmatprep.subr.bf16.mxu0 0
        %1072 = vmatpush1.bf16.msra.mxu0 0
        %1073 = vmatprep.mubr.bf16.mxu0 0
        %1074 = vmatmul.mubr.bf16.gmra.mrb[0].mxu0 %v973
        %v1075 = vpop.f32.mrb[0].mxu0
        %v1076 = vadd.f32 0.0, %v1075
        %v1077 = vpop.f32.mrb[0].mxu0
        %v1078 = vpop.f32.mrb[0].mxu0
        %v1079 = vadd.f32 0.0, %v1078
        %v1080 = vpop.f32.mrb[0].mxu0
        %1081 = vmatprep.mubr.bf16.mxu0 0
        %1082 = vmatmul.mubr.bf16.gmra.mrb[0].mxu0 %v974
        %v1083 = vpop.f32.mrb[0].mxu0
        %v1084 = vadd.f32 0.0, %v1083
        %v1085 = vpop.f32.mrb[0].mxu0
        %v1086 = vpop.f32.mrb[0].mxu0
        %v1087 = vadd.f32 0.0, %v1086
        %v1088 = vpop.f32.mrb[0].mxu0
        %1089 = vmatprep.mubr.bf16.mxu0 0
        %1090 = vmatmul.mubr.bf16.gmra.mrb[0].mxu0 %v975
        %v1091 = vpop.f32.mrb[0].mxu0
        %v1092 = vadd.f32 0.0, %v1091
        %v1093 = vpop.f32.mrb[0].mxu0
        %v1094 = vpop.f32.mrb[0].mxu0
        %v1095 = vadd.f32 0.0, %v1094
        %v1096 = vpop.f32.mrb[0].mxu0
        %1097 = vmatprep.mubr.bf16.mxu0 0
        %1098 = vmatmul.mubr.bf16.gmra.mrb[0].mxu0 %v976
        %v1099 = vpop.f32.mrb[0].mxu0
        %v1100 = vadd.f32 0.0, %v1099
        %v1101 = vpop.f32.mrb[0].mxu0
        %v1102 = vpop.f32.mrb[0].mxu0
        %v1103 = vadd.f32 0.0, %v1102
        %v1104 = vpop.f32.mrb[0].mxu0
        %1105 = vdwg.mxu0
        %v1106 = vmax.f32 %v958, 1e-20
        %v1107 = vmax.f32 %v960, 1e-20
        %v1108 = vmax.f32 %v962, 1e-20
        %v1109 = vmax.f32 %v964, 1e-20
        %v1110 = vmax.f32 %v966, 1e-20
        %v1111 = vmax.f32 %v968, 1e-20
        %v1112 = vmax.f32 %v970, 1e-20
        %v1113 = vmax.f32 %v972, 1e-20
        %v1114 = vrcp.pop %v1106
        %v1115 = vrcp.pop %v1107
        %v1116 = vrcp.pop %v1108
        %v1117 = vrcp.pop %v1109
        %v1118 = vrcp.pop %v1110
        %v1119 = vrcp.pop %v1111
        %v1120 = vrcp.pop %v1112
        %v1121 = vrcp.pop %v1113
        %v1122 = vmul.f32 %v1076, %v1114
        %v1123 = vmul.f32 %v1079, %v1115
        %v1124 = vmul.f32 %v1084, %v1116
        %v1125 = vmul.f32 %v1087, %v1117
        %v1126 = vmul.f32 %v1092, %v1118
        %v1127 = vmul.f32 %v1095, %v1119
        %v1128 = vmul.f32 %v1100, %v1120
        %v1129 = vmul.f32 %v1103, %v1121
        %vm1130 = vcmp.gt.f32.partialorder %v1122, 0.0
        %vm1131 = vcmp.gt.f32.partialorder %v1123, 0.0
        %vm1132 = vcmp.gt.f32.partialorder %v1124, 0.0
        %vm1133 = vcmp.gt.f32.partialorder %v1125, 0.0
        %vm1134 = vcmp.gt.f32.partialorder %v1126, 0.0
        %vm1135 = vcmp.gt.f32.partialorder %v1127, 0.0
        %vm1136 = vcmp.gt.f32.partialorder %v1128, 0.0
        %vm1137 = vcmp.gt.f32.partialorder %v1129, 0.0
        %v1138 = vmin.f32 %v1122, 0.0
        %v1139 = vmin.f32 %v1123, 0.0
        %v1140 = vmin.f32 %v1124, 0.0
        %v1141 = vmin.f32 %v1125, 0.0
        %v1142 = vmin.f32 %v1126, 0.0
        %v1143 = vmin.f32 %v1127, 0.0
        %v1144 = vmin.f32 %v1128, 0.0
        %v1145 = vmin.f32 %v1129, 0.0
        %v1146 = vmul.f32 %v1138, 1.442695
        %v1147 = vpow.pop %v1146
        %v1148 = vmul.f32 %v1139, 1.442695
        %v1149 = vpow.pop %v1148
        %v1150 = vmul.f32 %v1140, 1.442695
        %v1151 = vpow.pop %v1150
        %v1152 = vmul.f32 %v1141, 1.442695
        %v1153 = vpow.pop %v1152
        %v1154 = vmul.f32 %v1142, 1.442695
        %v1155 = vpow.pop %v1154
        %v1156 = vmul.f32 %v1143, 1.442695
        %v1157 = vpow.pop %v1156
        %v1158 = vmul.f32 %v1144, 1.442695
        %v1159 = vpow.pop %v1158
        %v1160 = vmul.f32 %v1145, 1.442695
        %v1161 = vpow.pop %v1160
        %v1162 = vsub.f32 %v1147, 1.0
        %v1163 = vsub.f32 %v1149, 1.0
        %v1164 = vsub.f32 %v1151, 1.0
        %v1165 = vsub.f32 %v1153, 1.0
        %v1166 = vsub.f32 %v1155, 1.0
        %v1167 = vsub.f32 %v1157, 1.0
        %v1168 = vsub.f32 %v1159, 1.0
        %v1169 = vsub.f32 %v1161, 1.0
        %v1170 = vsel %vm1130, %v1122, %v1162
        %v1171 = vsel %vm1131, %v1123, %v1163
        %v1172 = vsel %vm1132, %v1124, %v1164
        %v1173 = vsel %vm1133, %v1125, %v1165
        %v1174 = vsel %vm1134, %v1126, %v1166
        %v1175 = vsel %vm1135, %v1127, %v1167
        %v1176 = vsel %vm1136, %v1128, %v1168
        %v1177 = vsel %vm1137, %v1129, %v1169
        %v1178 = vpack.c.bf16 %v1171, %v1170
        %v1179 = vpack.c.bf16 %v1173, %v1172
        %v1180 = vpack.c.bf16 %v1175, %v1174
        %v1181 = vpack.c.bf16 %v1177, %v1176
        %v1182 = vld [vmem:[#allocation10] sm:$0xff]
        %v1183 = vld [vmem:[#allocation10 + $0x8] sm:$0xf]
        %v1184 = vld [vmem:[#allocation10 + $0xc] sm:$0xff]
        %v1185 = vld [vmem:[#allocation10 + $0x14] sm:$0xf]
        %v1186 = vld [vmem:[#allocation10 + $0x18] sm:$0xff]
        %v1187 = vld [vmem:[#allocation10 + $0x20] sm:$0xf]
        %v1188 = vld [vmem:[#allocation10 + $0x24] sm:$0xff]
        %v1189 = vld [vmem:[#allocation10 + $0x2c] sm:$0xf]
        %v1190 = vld [vmem:[#allocation10 + $0x30] sm:$0xff]
        %v1191 = vld [vmem:[#allocation10 + $0x38] sm:$0xf]
        %v1192 = vld [vmem:[#allocation10 + $0x3c] sm:$0xff]
        %v1193 = vld [vmem:[#allocation10 + $0x44] sm:$0xf]
        %v1194 = vld [vmem:[#allocation10 + $0x48] sm:$0xff]
        %v1195 = vld [vmem:[#allocation10 + $0x50] sm:$0xf]
        %v1196 = vld [vmem:[#allocation10 + $0x54] sm:$0xff]
        %v1197 = vld [vmem:[#allocation10 + $0x5c] sm:$0xf]
        %v1198 = vld [vmem:[#allocation10 + $0x60] sm:$0xff]
        %v1199 = vld [vmem:[#allocation10 + $0x68] sm:$0xf]
        %v1200 = vld [vmem:[#allocation10 + $0x6c] sm:$0xff]
        %v1201 = vld [vmem:[#allocation10 + $0x74] sm:$0xf]
        %v1202 = vld [vmem:[#allocation10 + $0x78] sm:$0xff]
        %v1203 = vld [vmem:[#allocation10 + $0x80] sm:$0xf]
        %v1204 = vld [vmem:[#allocation10 + $0x84] sm:$0xff]
        %v1205 = vld [vmem:[#allocation10 + $0x8c] sm:$0xf]
        %v1206 = vld [vmem:[#allocation10 + $0x90] sm:$0xff]
        %v1207 = vld [vmem:[#allocation10 + $0x98] sm:$0xf]
        %v1208 = vld [vmem:[#allocation10 + $0x9c] sm:$0xff]
        %v1209 = vld [vmem:[#allocation10 + $0xa4] sm:$0xf]
        %v1210 = vld [vmem:[#allocation10 + $0xa8] sm:$0xff]
        %v1211 = vld [vmem:[#allocation10 + $0xb0] sm:$0xf]
        %v1212 = vld [vmem:[#allocation10 + $0xb4] sm:$0xff]
        %v1213 = vld [vmem:[#allocation10 + $0xbc] sm:$0xf]
        %v1214 = vld [vmem:[%s5] sm:$0x7]
        %v1216 = vlaneseq
        %v1217 = vshrl.u32 %v1216, 7
        %v1218 = vsub.s32 0, %v1217
        %v1219 = vrot.slane %v1214, %v1218
        %v1220 = vlaneseq
        %v1221 = vshrl.u32 %v1220, 7
        %v1222 = vsub.s32 1, %v1221
        %v1223 = vrot.slane %v1214, %v1222
        %v1224 = vlaneseq
        %v1225 = vshrl.u32 %v1224, 7
        %v1226 = vsub.s32 2, %v1225
        %v1227 = vrot.slane %v1214, %v1226
        %v1263 = vunpack.c.l.b16 %v1182
        %v1264 = vunpack.c.h.b16 %v1182
        %v1265 = vunpack.c.l.b16 %v1183
        %v1266 = vunpack.c.l.b16 %v1184
        %v1267 = vunpack.c.h.b16 %v1184
        %v1268 = vunpack.c.l.b16 %v1185
        %v1269 = vunpack.c.l.b16 %v1186
        %v1270 = vunpack.c.h.b16 %v1186
        %v1271 = vunpack.c.l.b16 %v1187
        %v1272 = vunpack.c.l.b16 %v1188
        %v1273 = vunpack.c.h.b16 %v1188
        %v1274 = vunpack.c.l.b16 %v1189
        %v1275 = vunpack.c.l.b16 %v1190
        %v1276 = vunpack.c.h.b16 %v1190
        %v1277 = vunpack.c.l.b16 %v1191
        %v1278 = vunpack.c.l.b16 %v1192
        %v1279 = vunpack.c.h.b16 %v1192
        %v1280 = vunpack.c.l.b16 %v1193
        %v1281 = vunpack.c.l.b16 %v1194
        %v1282 = vunpack.c.h.b16 %v1194
        %v1283 = vunpack.c.l.b16 %v1195
        %v1284 = vunpack.c.l.b16 %v1196
        %v1285 = vunpack.c.h.b16 %v1196
        %v1286 = vunpack.c.l.b16 %v1197
        %v1287 = vunpack.c.l.b16 %v1198
        %v1288 = vunpack.c.h.b16 %v1198
        %v1289 = vunpack.c.l.b16 %v1199
        %v1290 = vunpack.c.l.b16 %v1200
        %v1291 = vunpack.c.h.b16 %v1200
        %v1292 = vunpack.c.l.b16 %v1201
        %v1293 = vunpack.c.l.b16 %v1202
        %v1294 = vunpack.c.h.b16 %v1202
        %v1295 = vunpack.c.l.b16 %v1203
        %v1296 = vunpack.c.l.b16 %v1204
        %v1297 = vunpack.c.h.b16 %v1204
        %v1298 = vunpack.c.l.b16 %v1205
        %v1299 = vunpack.c.l.b16 %v1206
        %v1300 = vunpack.c.h.b16 %v1206
        %v1301 = vunpack.c.l.b16 %v1207
        %v1302 = vunpack.c.l.b16 %v1208
        %v1303 = vunpack.c.h.b16 %v1208
        %v1304 = vunpack.c.l.b16 %v1209
        %v1305 = vunpack.c.l.b16 %v1210
        %v1306 = vunpack.c.h.b16 %v1210
        %v1307 = vunpack.c.l.b16 %v1211
        %v1308 = vunpack.c.l.b16 %v1212
        %v1309 = vunpack.c.h.b16 %v1212
        %v1310 = vunpack.c.l.b16 %v1213
        %v1311 = vpack.c.b16 %v1266, %v1263
        %v1312 = vpack.c.b16 %v1267, %v1264
        %v1313 = vpack.c.b16 %v1268, %v1265
        %v1314 = vpack.c.b16 %v1272, %v1269
        %v1315 = vpack.c.b16 %v1273, %v1270
        %v1316 = vpack.c.b16 %v1274, %v1271
        %v1317 = vpack.c.b16 %v1278, %v1275
        %v1318 = vpack.c.b16 %v1279, %v1276
        %v1319 = vpack.c.b16 %v1280, %v1277
        %v1320 = vpack.c.b16 %v1284, %v1281
        %v1321 = vpack.c.b16 %v1285, %v1282
        %v1322 = vpack.c.b16 %v1286, %v1283
        %v1323 = vpack.c.b16 %v1290, %v1287
        %v1324 = vpack.c.b16 %v1291, %v1288
        %v1325 = vpack.c.b16 %v1292, %v1289
        %v1326 = vpack.c.b16 %v1296, %v1293
        %v1327 = vpack.c.b16 %v1297, %v1294
        %v1328 = vpack.c.b16 %v1298, %v1295
        %v1329 = vpack.c.b16 %v1302, %v1299
        %v1330 = vpack.c.b16 %v1303, %v1300
        %v1331 = vpack.c.b16 %v1304, %v1301
        %v1332 = vpack.c.b16 %v1308, %v1305
        %v1333 = vpack.c.b16 %v1309, %v1306
        %v1334 = vpack.c.b16 %v1310, %v1307
        %1359 = vmatprep.subr.bf16.mxu0 %v1312
        %1360 = vmatpush1.bf16.msra.mxu0 %v1311
        %1361 = vmatprep.subr.bf16.mxu0 %v1315
        %1362 = vmatpush1.bf16.msra.mxu0 %v1314
        %1363 = vmatprep.subr.bf16.mxu0 %v1318
        %1364 = vmatpush1.bf16.msra.mxu0 %v1317
        %1365 = vmatprep.subr.bf16.mxu0 %v1321
        %1366 = vmatpush1.bf16.msra.mxu0 %v1320
        %1367 = vmatprep.subr.bf16.mxu0 %v1324
        %1368 = vmatpush1.bf16.msra.mxu0 %v1323
        %1369 = vmatprep.subr.bf16.mxu0 %v1327
        %1370 = vmatpush1.bf16.msra.mxu0 %v1326
        %1371 = vmatprep.subr.bf16.mxu0 %v1330
        %1372 = vmatpush1.bf16.msra.mxu0 %v1329
        %1373 = vmatprep.subr.bf16.mxu0 %v1333
        %1374 = vmatpush1.bf16.msra.mxu0 %v1332
        %1375 = vmatprep.subr.bf16.mxu0 0
        %1376 = vmatpush1.bf16.msra.mxu0 0
        %1377 = vmatprep.subr.bf16.mxu0 0
        %1378 = vmatpush1.bf16.msra.mxu0 0
        %1379 = vmatprep.subr.bf16.mxu0 0
        %1380 = vmatpush1.bf16.msra.mxu0 0
        %1381 = vmatprep.subr.bf16.mxu0 0
        %1382 = vmatpush1.bf16.msra.mxu0 0
        %1383 = vmatprep.subr.bf16.mxu0 0
        %1384 = vmatpush1.bf16.msra.mxu0 0
        %1385 = vmatprep.subr.bf16.mxu0 0
        %1386 = vmatpush1.bf16.msra.mxu0 0
        %1387 = vmatprep.subr.bf16.mxu0 0
        %1388 = vmatpush1.bf16.msra.mxu0 0
        %1389 = vmatprep.subr.bf16.mxu0 0
        %1390 = vmatpush1.bf16.msra.mxu0 0
        %1391 = vmatprep.mubr.bf16.mxu0 0
        %1392 = vmatmul.mubr.bf16.gmra.mrb[0].mxu0 %v1178
        %v1393 = vpop.f32.mrb[0].mxu0
        %v1394 = vadd.f32 %v1219, %v1393
        %v1395 = vpop.f32.mrb[0].mxu0
        %v1396 = vadd.f32 %v1223, %v1395
        %v1397 = vpop.f32.mrb[0].mxu0
        %v1398 = vadd.f32 %v1219, %v1397
        %v1399 = vpop.f32.mrb[0].mxu0
        %v1400 = vadd.f32 %v1223, %v1399
        %1401 = vmatprep.mubr.bf16.mxu0 0
        %1402 = vmatmul.mubr.bf16.gmra.mrb[0].mxu0 %v1179
        %v1403 = vpop.f32.mrb[0].mxu0
        %v1404 = vadd.f32 %v1219, %v1403
        %v1405 = vpop.f32.mrb[0].mxu0
        %v1406 = vadd.f32 %v1223, %v1405
        %v1407 = vpop.f32.mrb[0].mxu0
        %v1408 = vadd.f32 %v1219, %v1407
        %v1409 = vpop.f32.mrb[0].mxu0
        %v1410 = vadd.f32 %v1223, %v1409
        %1411 = vmatprep.mubr.bf16.mxu0 0
        %1412 = vmatmul.mubr.bf16.gmra.mrb[0].mxu0 %v1180
        %v1413 = vpop.f32.mrb[0].mxu0
        %v1414 = vadd.f32 %v1219, %v1413
        %v1415 = vpop.f32.mrb[0].mxu0
        %v1416 = vadd.f32 %v1223, %v1415
        %v1417 = vpop.f32.mrb[0].mxu0
        %v1418 = vadd.f32 %v1219, %v1417
        %v1419 = vpop.f32.mrb[0].mxu0
        %v1420 = vadd.f32 %v1223, %v1419
        %1421 = vmatprep.mubr.bf16.mxu0 0
        %1422 = vmatmul.mubr.bf16.gmra.mrb[0].mxu0 %v1181
        %v1423 = vpop.f32.mrb[0].mxu0
        %v1424 = vadd.f32 %v1219, %v1423
        %v1425 = vpop.f32.mrb[0].mxu0
        %v1426 = vadd.f32 %v1223, %v1425
        %v1427 = vpop.f32.mrb[0].mxu0
        %v1428 = vadd.f32 %v1219, %v1427
        %v1429 = vpop.f32.mrb[0].mxu0
        %v1430 = vadd.f32 %v1223, %v1429
        %1431 = vdwg.mxu0
        %1432 = vmatprep.subr.bf16.mxu0 0
        %1433 = vmatpush1.bf16.msra.mxu0 %v1313
        %1434 = vmatprep.subr.bf16.mxu0 0
        %1435 = vmatpush1.bf16.msra.mxu0 %v1316
        %1436 = vmatprep.subr.bf16.mxu0 0
        %1437 = vmatpush1.bf16.msra.mxu0 %v1319
        %1438 = vmatprep.subr.bf16.mxu0 0
        %1439 = vmatpush1.bf16.msra.mxu0 %v1322
        %1440 = vmatprep.subr.bf16.mxu0 0
        %1441 = vmatpush1.bf16.msra.mxu0 %v1325
        %1442 = vmatprep.subr.bf16.mxu0 0
        %1443 = vmatpush1.bf16.msra.mxu0 %v1328
        %1444 = vmatprep.subr.bf16.mxu0 0
        %1445 = vmatpush1.bf16.msra.mxu0 %v1331
        %1446 = vmatprep.subr.bf16.mxu0 0
        %1447 = vmatpush1.bf16.msra.mxu0 %v1334
        %1448 = vmatprep.subr.bf16.mxu0 0
        %1449 = vmatpush1.bf16.msra.mxu0 0
        %1450 = vmatprep.subr.bf16.mxu0 0
        %1451 = vmatpush1.bf16.msra.mxu0 0
        %1452 = vmatprep.subr.bf16.mxu0 0
        %1453 = vmatpush1.bf16.msra.mxu0 0
        %1454 = vmatprep.subr.bf16.mxu0 0
        %1455 = vmatpush1.bf16.msra.mxu0 0
        %1456 = vmatprep.subr.bf16.mxu0 0
        %1457 = vmatpush1.bf16.msra.mxu0 0
        %1458 = vmatprep.subr.bf16.mxu0 0
        %1459 = vmatpush1.bf16.msra.mxu0 0
        %1460 = vmatprep.subr.bf16.mxu0 0
        %1461 = vmatpush1.bf16.msra.mxu0 0
        %1462 = vmatprep.subr.bf16.mxu0 0
        %1463 = vmatpush1.bf16.msra.mxu0 0
        %1464 = vmatprep.mubr.bf16.mxu0 0
        %1465 = vmatmul.mubr.bf16.gmra.mrb[0].mxu0 %v1178
        %v1466 = vpop.f32.mrb[0].mxu0
        %v1467 = vadd.f32 %v1227, %v1466
        %v1468 = vpop.f32.mrb[0].mxu0
        %v1469 = vpop.f32.mrb[0].mxu0
        %v1470 = vadd.f32 %v1227, %v1469
        %v1471 = vpop.f32.mrb[0].mxu0
        %1472 = vmatprep.mubr.bf16.mxu0 0
        %1473 = vmatmul.mubr.bf16.gmra.mrb[0].mxu0 %v1179
        %v1474 = vpop.f32.mrb[0].mxu0
        %v1475 = vadd.f32 %v1227, %v1474
        %v1476 = vpop.f32.mrb[0].mxu0
        %v1477 = vpop.f32.mrb[0].mxu0
        %v1478 = vadd.f32 %v1227, %v1477
        %v1479 = vpop.f32.mrb[0].mxu0
        %1480 = vmatprep.mubr.bf16.mxu0 0
        %1481 = vmatmul.mubr.bf16.gmra.mrb[0].mxu0 %v1180
        %v1482 = vpop.f32.mrb[0].mxu0
        %v1483 = vadd.f32 %v1227, %v1482
        %v1484 = vpop.f32.mrb[0].mxu0
        %v1485 = vpop.f32.mrb[0].mxu0
        %v1486 = vadd.f32 %v1227, %v1485
        %v1487 = vpop.f32.mrb[0].mxu0
        %1488 = vmatprep.mubr.bf16.mxu0 0
        %1489 = vmatmul.mubr.bf16.gmra.mrb[0].mxu0 %v1181
        %v1490 = vpop.f32.mrb[0].mxu0
        %v1491 = vadd.f32 %v1227, %v1490
        %v1492 = vpop.f32.mrb[0].mxu0
        %v1493 = vpop.f32.mrb[0].mxu0
        %v1494 = vadd.f32 %v1227, %v1493
        %v1495 = vpop.f32.mrb[0].mxu0
        %1496 = vdwg.mxu0
        %v1497 = vadd.f32 %v1394, %v685
        %v1498 = vadd.f32 %v1398, %v689
        %v1499 = vadd.f32 %v1404, %v695
        %v1500 = vadd.f32 %v1408, %v699
        %v1501 = vadd.f32 %v1414, %v705
        %v1502 = vadd.f32 %v1418, %v709
        %v1503 = vadd.f32 %v1424, %v715
        %v1504 = vadd.f32 %v1428, %v719
        %v1505 = vxor.u32 %v1497, 2147483648
        %v1506 = vxor.u32 %v1498, 2147483648
        %v1507 = vxor.u32 %v1499, 2147483648
        %v1508 = vxor.u32 %v1500, 2147483648
        %v1509 = vxor.u32 %v1501, 2147483648
        %v1510 = vxor.u32 %v1502, 2147483648
        %v1511 = vxor.u32 %v1503, 2147483648
        %v1512 = vxor.u32 %v1504, 2147483648
        %v1513 = vmul.f32 %v1505, 1.442695
        %v1514 = vpow.pop %v1513
        %v1515 = vmul.f32 %v1506, 1.442695
        %v1516 = vpow.pop %v1515
        %v1517 = vmul.f32 %v1507, 1.442695
        %v1518 = vpow.pop %v1517
        %v1519 = vmul.f32 %v1508, 1.442695
        %v1520 = vpow.pop %v1519
        %v1521 = vmul.f32 %v1509, 1.442695
        %v1522 = vpow.pop %v1521
        %v1523 = vmul.f32 %v1510, 1.442695
        %v1524 = vpow.pop %v1523
        %v1525 = vmul.f32 %v1511, 1.442695
        %v1526 = vpow.pop %v1525
        %v1527 = vmul.f32 %v1512, 1.442695
        %v1528 = vpow.pop %v1527
        %v1529 = vadd.f32 %v1514, 1.0
        %v1530 = vadd.f32 %v1516, 1.0
        %v1531 = vadd.f32 %v1518, 1.0
        %v1532 = vadd.f32 %v1520, 1.0
        %v1533 = vadd.f32 %v1522, 1.0
        %v1534 = vadd.f32 %v1524, 1.0
        %v1535 = vadd.f32 %v1526, 1.0
        %v1536 = vadd.f32 %v1528, 1.0
        %v1537 = vrcp.pop %v1529
        %v1538 = vmul.f32 1.0, %v1537
        %v1539 = vrcp.pop %v1530
        %v1540 = vmul.f32 1.0, %v1539
        %v1541 = vrcp.pop %v1531
        %v1542 = vmul.f32 1.0, %v1541
        %v1543 = vrcp.pop %v1532
        %v1544 = vmul.f32 1.0, %v1543
        %v1545 = vrcp.pop %v1533
        %v1546 = vmul.f32 1.0, %v1545
        %v1547 = vrcp.pop %v1534
        %v1548 = vmul.f32 1.0, %v1547
        %v1549 = vrcp.pop %v1535
        %v1550 = vmul.f32 1.0, %v1549
        %v1551 = vrcp.pop %v1536
        %v1552 = vmul.f32 1.0, %v1551
        %v1553 = vadd.f32 %v1396, %v687
        %v1554 = vadd.f32 %v1400, %v691
        %v1555 = vadd.f32 %v1406, %v697
        %v1556 = vadd.f32 %v1410, %v701
        %v1557 = vadd.f32 %v1416, %v707
        %v1558 = vadd.f32 %v1420, %v711
        %v1559 = vadd.f32 %v1426, %v717
        %v1560 = vadd.f32 %v1430, %v721
        %v1561 = vxor.u32 %v1553, 2147483648
        %v1562 = vxor.u32 %v1554, 2147483648
        %v1563 = vxor.u32 %v1555, 2147483648
        %v1564 = vxor.u32 %v1556, 2147483648
        %v1565 = vxor.u32 %v1557, 2147483648
        %v1566 = vxor.u32 %v1558, 2147483648
        %v1567 = vxor.u32 %v1559, 2147483648
        %v1568 = vxor.u32 %v1560, 2147483648
        %v1569 = vmul.f32 %v1561, 1.442695
        %v1570 = vpow.pop %v1569
        %v1571 = vmul.f32 %v1562, 1.442695
        %v1572 = vpow.pop %v1571
        %v1573 = vmul.f32 %v1563, 1.442695
        %v1574 = vpow.pop %v1573
        %v1575 = vmul.f32 %v1564, 1.442695
        %v1576 = vpow.pop %v1575
        %v1577 = vmul.f32 %v1565, 1.442695
        %v1578 = vpow.pop %v1577
        %v1579 = vmul.f32 %v1566, 1.442695
        %v1580 = vpow.pop %v1579
        %v1581 = vmul.f32 %v1567, 1.442695
        %v1582 = vpow.pop %v1581
        %v1583 = vmul.f32 %v1568, 1.442695
        %v1584 = vpow.pop %v1583
        %v1585 = vadd.f32 %v1570, 1.0
        %v1586 = vadd.f32 %v1572, 1.0
        %v1587 = vadd.f32 %v1574, 1.0
        %v1588 = vadd.f32 %v1576, 1.0
        %v1589 = vadd.f32 %v1578, 1.0
        %v1590 = vadd.f32 %v1580, 1.0
        %v1591 = vadd.f32 %v1582, 1.0
        %v1592 = vadd.f32 %v1584, 1.0
        %v1593 = vrcp.pop %v1585
        %v1594 = vmul.f32 1.0, %v1593
        %v1595 = vrcp.pop %v1586
        %v1596 = vmul.f32 1.0, %v1595
        %v1597 = vrcp.pop %v1587
        %v1598 = vmul.f32 1.0, %v1597
        %v1599 = vrcp.pop %v1588
        %v1600 = vmul.f32 1.0, %v1599
        %v1601 = vrcp.pop %v1589
        %v1602 = vmul.f32 1.0, %v1601
        %v1603 = vrcp.pop %v1590
        %v1604 = vmul.f32 1.0, %v1603
        %v1605 = vrcp.pop %v1591
        %v1606 = vmul.f32 1.0, %v1605
        %v1607 = vrcp.pop %v1592
        %v1608 = vmul.f32 1.0, %v1607
        %v1609 = vmul.f32 %v1538, %v758
        %v1610 = vmul.f32 %v1540, %v762
        %v1611 = vmul.f32 %v1542, %v768
        %v1612 = vmul.f32 %v1544, %v772
        %v1613 = vmul.f32 %v1546, %v778
        %v1614 = vmul.f32 %v1548, %v782
        %v1615 = vmul.f32 %v1550, %v788
        %v1616 = vmul.f32 %v1552, %v792
        %v1617 = vadd.f32 %v1467, %v1609
        %v1618 = vadd.f32 %v1470, %v1610
        %v1619 = vadd.f32 %v1475, %v1611
        %v1620 = vadd.f32 %v1478, %v1612
        %v1621 = vadd.f32 %v1483, %v1613
        %v1622 = vadd.f32 %v1486, %v1614
        %v1623 = vadd.f32 %v1491, %v1615
        %v1624 = vadd.f32 %v1494, %v1616
        %v1625 = vtanh.pop %v1617
        %v1626 = vtanh.pop %v1618
        %v1627 = vtanh.pop %v1619
        %v1628 = vtanh.pop %v1620
        %v1629 = vtanh.pop %v1621
        %v1630 = vtanh.pop %v1622
        %v1631 = vtanh.pop %v1623
        %v1632 = vtanh.pop %v1624
        %v1633 = vsub.f32 1.0, %v1594
        %v1634 = vsub.f32 1.0, %v1596
        %v1635 = vsub.f32 1.0, %v1598
        %v1636 = vsub.f32 1.0, %v1600
        %v1637 = vsub.f32 1.0, %v1602
        %v1638 = vsub.f32 1.0, %v1604
        %v1639 = vsub.f32 1.0, %v1606
        %v1640 = vsub.f32 1.0, %v1608
        %v1641 = vmul.f32 %v1633, %v1625
        %v1642 = vmul.f32 %v1634, %v1626
        %v1643 = vmul.f32 %v1635, %v1627
        %v1644 = vmul.f32 %v1636, %v1628
        %v1645 = vmul.f32 %v1637, %v1629
        %v1646 = vmul.f32 %v1638, %v1630
        %v1647 = vmul.f32 %v1639, %v1631
        %v1648 = vmul.f32 %v1640, %v1632
        %v1649 = vmul.f32 %v1594, %v424
        %v1650 = vmul.f32 %v1596, %v425
        %v1651 = vmul.f32 %v1598, %v426
        %v1652 = vmul.f32 %v1600, %v427
        %v1653 = vmul.f32 %v1602, %v428
        %v1654 = vmul.f32 %v1604, %v429
        %v1655 = vmul.f32 %v1606, %v430
        %v1656 = vmul.f32 %v1608, %v431
        %v1657 = vadd.f32 %v1641, %v1649
        %v1658 = vadd.f32 %v1642, %v1650
        %v1659 = vadd.f32 %v1643, %v1651
        %v1660 = vadd.f32 %v1644, %v1652
        %v1661 = vadd.f32 %v1645, %v1653
        %v1662 = vadd.f32 %v1646, %v1654
        %v1663 = vadd.f32 %v1647, %v1655
        %v1664 = vadd.f32 %v1648, %v1656
        %v1665 = vmax.f32 %v1657, 0.0
        %v1666 = vmax.f32 %v1658, 0.0
        %v1667 = vmax.f32 %v1659, 0.0
        %v1668 = vmax.f32 %v1660, 0.0
        %v1669 = vmax.f32 %v1661, 0.0
        %v1670 = vmax.f32 %v1662, 0.0
        %v1671 = vmax.f32 %v1663, 0.0
        %v1672 = vmax.f32 %v1664, 0.0
        %1673 = vst [vmem:[%s419] sm:$0xff] %v1665
        %1674 = vst [vmem:[%s419 + $0x8] sm:$0xff] %v1666
        %1675 = vst [vmem:[%s419 + $0x10] sm:$0xff] %v1667
        %1676 = vst [vmem:[%s419 + $0x18] sm:$0xff] %v1668
        %1677 = vst [vmem:[%s419 + $0x20] sm:$0xff] %v1669
        %1678 = vst [vmem:[%s419 + $0x28] sm:$0xff] %v1670
        %1679 = vst [vmem:[%s419 + $0x30] sm:$0xff] %v1671
        %1680 = vst [vmem:[%s419 + $0x38] sm:$0xff] %v1672
        %s1681 = sand.u32 %s216, 1
        %s1682 = scalar_lea.sflag [#allocation4], %s1681
        %s1683 = sand.u32 %s216, 1
        %s1684 = smul.addr %s1683, 64
        %s1685 = scalar_lea.vmem [#allocation13], %s1684
        // Predicated region
        $region77: #{tpu_custom_call.1} parent=51 // pred_check
          %p1686 = pneg %p226
        $region78: #{tpu_custom_call.1} parent=51 // pred_check_branch
          %1688 = sbr.rel (%p1686) target = $region80
        $region79: #{tpu_custom_call.1} parent=51 // pred_region
          %s1689 = smul.u32 8, %s30
          %s1691 = ssub.s32 1024, 1024
          %1692 = vsyncadd %s1682, %s1691
          %s1693 = smul.addr %s1689, 128
          %s1694 = scalar_lea.hbm %s8, %s1693
          %s1695 = sshll.u32 %s1685, 4
          %s1696 = int_to_ptr.vmem [resolvable:$true] %s1695
          %1701 = dma.vmem_to_hbm [thread:$0]  %s1696, 1024, %s1694, %s1682, 128, 128, 8
        $region80: #{tpu_custom_call.1} parent=51 // pred_fallthru
          _
      $region52: #{tpu_custom_call.1} parent=5 // pred_fallthru
        _
      %p1702 = scmp.le.s32.totalorder 2, %s25
      // Predicated region
      $region81: #{tpu_custom_call.1} parent=5 // pred_check
        %p1703 = pneg %p1702
      $region82: #{tpu_custom_call.1} parent=5 // pred_check_branch
        %1705 = sbr.rel (%p1703) target = $region84
      $region83: #{tpu_custom_call.1} parent=5 // pred_region
        %s1706 = ssub.s32 %s25, 2
        // Predicated region
        $region85: #{tpu_custom_call.1} parent=83 // pred_check
          %p1707 = pneg %p232
        $region86: #{tpu_custom_call.1} parent=83 // pred_check_branch
          %1709 = sbr.rel (%p1707) target = $region88
        $region87: #{tpu_custom_call.1} parent=83 // pred_region
          %s1710 = sand.u32 %s217, 1
          %s1711 = scalar_lea.sflag [#allocation4], %s1710
          %s1712 = sand.u32 %s217, 1
          %s1713 = smul.addr %s1712, 64
          %s1714 = scalar_lea.vmem [#allocation13], %s1713
          %1715 = dma.done %s1711, 1024
        $region88: #{tpu_custom_call.1} parent=83 // pred_fallthru
          _
      $region84: #{tpu_custom_call.1} parent=5 // pred_fallthru
        _
    $region6: #{tpu_custom_call.1} parent=1 // loop_footer
      %s29 = sadd.s32 1, %s25
    $region7: #{tpu_custom_call.1} parent=1 // loop_footer_branch
      %24 = sbr.rel target = $region3
    $region8: #{tpu_custom_call.1} parent=1 // loop_exit
      _
    %1716 = vsyncpa [#allocation3], 1
    %s1717 = scalar_lea.sflag [#allocation3], 1
    %1718 = vsyncpa %s1717, 1
    %1719 = vsyncpa [#allocation6], 1
    %s1720 = scalar_lea.sflag [#allocation6], 1
    %1721 = vsyncpa %s1720, 1
    %1722 = vsyncpa [#allocation9], 1
    %1723 = vsyncpa [#allocation12], 1
    %1724 = vsyncpa [#allocation4], 1
    %s1725 = scalar_lea.sflag [#allocation4], 1
    %1726 = vsyncpa %s1725, 1

</llo_original>
